<compile_context>
chip_gen: v7x
topology: tpu7x:2x2x1
jax: 0.10.0
libtpu: 0.0.40
codegen_flags: <defaults>
</compile_context>

<pallas_src>
import functools

import jax
import jax.numpy as jnp
from jax.experimental import pallas as pl
from jax.experimental.pallas import tpu as pltpu

_LANE = 128


def _round_up(x, m):
    return ((x + m - 1) // m) * m


# ---------------------------------------------------------------------------
# Fused Pallas kernel: encoder linear + projection head + folded row-sum
# (transposed dataflow: [D_pad, tm] activations, node columns on the lane axis)
# ---------------------------------------------------------------------------

def _ggd_fused_kernel(aggT_ref, wencT_ref, bencT_ref, whidT_ref, bhidT_ref,
                      wvec_ref, beff_ref, o_ref, *, n_hidden):
    # encoder dense part: relu(W_enc^T @ agg^T + b_enc)
    h = jnp.dot(wencT_ref[...], aggT_ref[...], preferred_element_type=jnp.float32)
    h = jnp.maximum(h + bencT_ref[...], 0.0)
    # projection head hidden layers (mlp[:-1] with relu), statically unrolled
    for l in range(n_hidden):
        h = jnp.dot(whidT_ref[l], h.astype(jnp.bfloat16),
                    preferred_element_type=jnp.float32)
        h = jnp.maximum(h + bhidT_ref[l], 0.0)
    # mlp[-1] + .sum(1) folded into a matvec.  wvec is sublane-replicated to 8 rows so the
    # MXU sees a well-formed (8, D_pad) LHS; only row 0 is stored -> one lane-dense [1, tm]
    # f32 row per tile (4 B per node of writeback).
    acc = jnp.dot(wvec_ref[...], h.astype(jnp.bfloat16),
                  preferred_element_type=jnp.float32)
    o_ref[...] = acc[0:1, :] + beff_ref[0]


def ggd_encoder_head(agg, p):
    """agg: [M, D] float32 pre-aggregated node features (pos/neg batched). Returns [M] f32."""
    M, D = agg.shape
    D_pad = p["d_pad"]
    L_hid = p["whid"].shape[0]
    n_hidden = p["n_hidden"]

    # resident weight bytes (single copy)
    weight_bytes = (p["wenc"].size + p["whid"].size + p["wvec"].size) * 2 \
                 + (p["benc"].size + p["bhid"].size) * 4

    # VMEM budget from the actual chip (v7x: 64 MiB/TC -> ~48 MiB; v5e/v6e: 128 MiB -> 96 MiB)
    try:
        vmem_cap = int(getattr(pltpu.get_tpu_info(), "vmem_capacity_bytes", 64 << 20))
    except Exception:
        vmem_cap = 64 << 20
    budget = min((vmem_cap * 3) // 4, 96 << 20)

    # per-node-column VMEM bytes: double-buffered bf16 input column + f32 h and its bf16
    # cast (liveness ~2 across the layer handoff); the f32 output row is negligible.
    per_col = 2 * (D_pad * 2) + 2 * (D_pad * 4 + D_pad * 2)
    avail = budget - 2 * weight_bytes - (2 << 20)   # worst case: weights still double-buffered
    if avail < per_col * _LANE:
        # TODO(synk): weight-streaming fallback (extra layer/K grid axis) for very large D;
        # keep a minimal healthy lane-multiple tile instead of letting it collapse.
        tm_max = _LANE
    else:
        tm_max = max(_LANE, (min(avail // per_col, 2048) // _LANE) * _LANE)

    # choose the grid first to minimize padded-node waste; keep >= 2 tiles for megacore when
    # the graph is big enough; tile size is a lane multiple (nodes live on the lane axis).
    n_tiles = pl.cdiv(M, tm_max)
    if n_tiles == 1 and M > 4 * _LANE:
        n_tiles = 2
    tm = _round_up(pl.cdiv(M, n_tiles), _LANE)
    m_pad = n_tiles * tm

    # one fused pad + cast + transpose pass into the kernel layout (XLA fuses into one copy)
    aggT = jnp.pad(agg, ((0, m_pad - M), (0, D_pad - D))).astype(jnp.bfloat16).T  # [D_pad, m_pad]

    vmem_limit = int(min(max(2 * weight_bytes + tm * per_col + (4 << 20), 32 << 20), budget))
    flops = 2 * m_pad * D_pad * D_pad * (1 + n_hidden) + 2 * 8 * D_pad * m_pad
    cost = pl.CostEstimate(flops=int(flops), transcendentals=0,
                           bytes_accessed=int(m_pad * D_pad * 2 + weight_bytes + m_pad * 4))

    kernel = functools.partial(_ggd_fused_kernel, n_hidden=n_hidden)

    def build(single_buffer_weights):
        # resident weights: constant index maps; single-buffered when supported (saves VMEM)
        res_kw = dict(pipeline_mode=pl.Buffered(1)) if single_buffer_weights else {}
        return pl.pallas_call(
            kernel,
            out_shape=jax.ShapeDtypeStruct((1, m_pad), jnp.float32),
            grid_spec=pltpu.PrefetchScalarGridSpec(
                num_scalar_prefetch=0,
                grid=(n_tiles,),
                in_specs=[
                    pl.BlockSpec((D_pad, tm), lambda i: (0, i)),                 # activations, node-tiled on lanes
                    pl.BlockSpec((D_pad, D_pad), lambda i: (0, 0), **res_kw),    # W_enc^T (resident)
                    pl.BlockSpec((D_pad, 1), lambda i: (0, 0), **res_kw),        # b_enc column (resident)
                    pl.BlockSpec((L_hid, D_pad, D_pad), lambda i: (0, 0, 0), **res_kw),  # hidden W^T stack
                    pl.BlockSpec((L_hid, D_pad, 1), lambda i: (0, 0, 0), **res_kw),      # hidden b stack
                    pl.BlockSpec((8, D_pad), lambda i: (0, 0), **res_kw),        # folded last layer (resident)
                    pl.BlockSpec(memory_space=pltpu.MemorySpace.SMEM),           # folded last bias (scalar)
                ],
                out_specs=pl.BlockSpec((1, tm), lambda i: (0, i)),               # lane-dense [1, tm] row per tile
            ),
            compiler_params=pltpu.CompilerParams(
                dimension_semantics=("parallel",),
                vmem_limit_bytes=vmem_limit,
            ),
            cost_estimate=cost,
        )

    args = (aggT, p["wenc"], p["benc"], p["whid"], p["bhid"], p["wvec"], p["beff"])
    try:
        out = build(True)(*args)       # single-buffered resident weights
    except Exception:
        out = build(False)(*args)      # fallback: default (double-buffered) weight specs
    return out[0, :M]


# ---------------------------------------------------------------------------
# Parameter preparation: transpose+pad to lane width, fold last layer + row-sum, cast bf16
# ---------------------------------------------------------------------------

def prepare_ggd_params(w_enc, b_enc, w_list, b_list, hidden_dim):
    D = hidden_dim
    D_pad = _round_up(D, _LANE)   # NOTE: on v6e/v7x a 256 granule can be tried for D > 128

    def pad_wT(w):   # [D_in, D_out] -> transposed + padded [D_pad(out), D_pad(in)]
        return jnp.pad(w.T, ((0, D_pad - w.shape[1]), (0, D_pad - w.shape[0])))

    def pad_bT(b):   # [D_out] -> padded column [D_pad, 1]
        return jnp.pad(b, (0, D_pad - b.shape[0]))[:, None]

    wenc = pad_wT(w_enc).astype(jnp.bfloat16)
    benc = pad_bT(b_enc).astype(jnp.float32)

    hid_w, hid_b = [], []
    for w, b in zip(w_list[:-1], b_list[:-1]):
        hid_w.append(pad_wT(w).astype(jnp.bfloat16))
        hid_b.append(pad_bT(b).astype(jnp.float32))
    if not hid_w:
        # dummy slab so BlockSpecs are well-formed; kernel never reads it (n_hidden == 0)
        hid_w.append(jnp.zeros((D_pad, D_pad), jnp.bfloat16))
        hid_b.append(jnp.zeros((D_pad, 1), jnp.float32))
    whid = jnp.stack(hid_w, axis=0)
    bhid = jnp.stack(hid_b, axis=0)

    # fold mlp[-1] + sum(dim=1):  (h @ W + b).sum(1) == h @ (W @ 1) + sum(b)
    w_last, b_last = w_list[-1], b_list[-1]
    w_vec = jnp.pad(w_last.sum(axis=1), (0, D_pad - D))                       # [D_pad]
    wvec = jnp.broadcast_to(w_vec[None, :], (8, D_pad)).astype(jnp.bfloat16)  # 8-row LHS for MXU
    beff = jnp.array([b_last.sum()], jnp.float32)                             # SMEM scalar

    return dict(wenc=wenc, benc=benc, whid=whid, bhid=bhid, wvec=wvec, beff=beff,
                n_hidden=len(w_list) - 1, d_pad=D_pad)


# ---------------------------------------------------------------------------
# GGD forward (glue around the fused kernel)
# ---------------------------------------------------------------------------

def gcn_aggregate(x, edge_index):
    # message passing aggregation (data-dependent gather/scatter) as plain-JAX glue
    src, dst = edge_index[0], edge_index[1]
    N = x.shape[0]
    msg = jax.ops.segment_sum(x[src], dst, num_segments=N)
    deg = jax.ops.segment_sum(jnp.ones((src.shape[0],), x.dtype), dst, num_segments=N)
    return (x + msg) / (1.0 + deg)[:, None]


def ggd_forward(x, edge_index, prepared, perm_key):
    N = x.shape[0]
    # (stochastic augmentation branch deterministically skipped)
    perm = jax.random.permutation(perm_key, N)          # corruption: permute node rows
    # batch pos + corrupted-neg as ONE disjoint graph of 2N nodes: single aggregation pass
    # and a single fused kernel chain (no separate activation concat pass).
    x2 = jnp.concatenate([x, x[perm]], axis=0)          # [2N, D]
    ei2 = jnp.concatenate([edge_index, edge_index + N], axis=1)
    agg = gcn_aggregate(x2, ei2)                        # [2N, D]
    h = ggd_encoder_head(agg, prepared)                 # [2N]
    return h[:N], h[N:]


# ---------------------------------------------------------------------------
# Deterministic parameter init (PyTorch-Linear-style uniform init) + demo
# ---------------------------------------------------------------------------

def _linear_init(key, fan_in, fan_out):
    kw, kb = jax.random.split(key)
    bound = 1.0 / jnp.sqrt(fan_in)
    w = jax.random.uniform(kw, (fan_in, fan_out), jnp.float32, -bound, bound)
    b = jax.random.uniform(kb, (fan_out,), jnp.float32, -bound, bound)
    return w, b


def _reference_forward(x, edge_index, w_enc, b_enc, w_list, b_list, perm_key):
    # plain-JAX f32 reference of the same forward (loose sanity check vs bf16 kernel)
    N = x.shape[0]
    perm = jax.random.permutation(perm_key, N)

    def enc_head(xi):
        agg = gcn_aggregate(xi, edge_index)
        h = jnp.maximum(agg @ w_enc + b_enc, 0.0)
        for w, b in zip(w_list[:-1], b_list[:-1]):
            h = jnp.maximum(h @ w + b, 0.0)
        h = h @ w_list[-1] + b_list[-1]
        return h.sum(axis=1)

    return enc_head(x), enc_head(x[perm])


if __name__ == "__main__":
    N = 8           # number of graph nodes
    D = 32          # hidden_dim (encoder in/out dim)
    N_PROJ = 2      # number of projection MLP layers

    root = jax.random.PRNGKey(0)
    k_x, k_enc, k_mlp, k_perm = jax.random.split(root, 4)

    # inputs: bidirectional ring graph
    x = jax.random.normal(k_x, (N, D), jnp.float32)
    src = jnp.arange(N, dtype=jnp.int32)
    dst = (src + 1) % N
    edge_index = jnp.stack(
        [jnp.concatenate([src, dst]), jnp.concatenate([dst, src])], axis=0
    )  # [2, 2N]

    # parameters
    w_enc, b_enc = _linear_init(k_enc, D, D)
    mlp_keys = jax.random.split(k_mlp, N_PROJ)
    w_list, b_list = [], []
    for lk in mlp_keys:
        w, b = _linear_init(lk, D, D)
        w_list.append(w)
        b_list.append(b)

    prepared = prepare_ggd_params(w_enc, b_enc, w_list, b_list, D)

    pos_h, neg_h = ggd_forward(x, edge_index, prepared, k_perm)
    jax.block_until_ready((pos_h, neg_h))

    assert pos_h.shape == (N,) and neg_h.shape == (N,)

    # loose sanity check vs f32 reference (bf16 matmuls in the kernel)
    ref_pos, ref_neg = _reference_forward(x, edge_index, w_enc, b_enc, w_list, b_list, k_perm)
    assert jnp.allclose(pos_h, ref_pos, rtol=1e-1, atol=1e-1)
    assert jnp.allclose(neg_h, ref_neg, rtol=1e-1, atol=1e-1)

    print("KERNEL_OK")
</pallas_src>

<mosaic_0001>
module attributes {stable_mosaic.version = 11 : i64} {
  func.func @_ggd_fused_kernel(%arg0: i32, %arg1: memref<128x128xbf16, #tpu.memory_space<vmem>>, %arg2: memref<128x128xbf16, #tpu.memory_space<vmem>>, %arg3: memref<128x1xf32, #tpu.memory_space<vmem>>, %arg4: memref<1x128x128xbf16, #tpu.memory_space<vmem>>, %arg5: memref<1x128x1xf32, #tpu.memory_space<vmem>>, %arg6: memref<8x128xbf16, #tpu.memory_space<vmem>>, %arg7: memref<1xf32, #tpu.memory_space<smem>>, %arg8: memref<1x128xf32, #tpu.memory_space<vmem>>) attributes {dimension_semantics = [#tpu.dimension_semantics<parallel>], iteration_bounds = array<i64: 1>, scalar_prefetch = 0 : i64, scratch_operands = 0 : i64, tpu.core_type = #tpu.core_type<tc>, window_params = [{transform_indices = @transform_0, window_bounds = array<i64: 128, 128>}, {pipeline_mode = #tpu.pipeline_mode<synchronous>, transform_indices = @transform_1, window_bounds = array<i64: 128, 128>}, {pipeline_mode = #tpu.pipeline_mode<synchronous>, transform_indices = @transform_2, window_bounds = array<i64: 128, 1>}, {pipeline_mode = #tpu.pipeline_mode<synchronous>, transform_indices = @transform_3, window_bounds = array<i64: 1, 128, 128>}, {pipeline_mode = #tpu.pipeline_mode<synchronous>, transform_indices = @transform_4, window_bounds = array<i64: 1, 128, 1>}, {pipeline_mode = #tpu.pipeline_mode<synchronous>, transform_indices = @transform_5, window_bounds = array<i64: 8, 128>}, {transform_indices = @transform_6, window_bounds = array<i64: 1>}, {transform_indices = @transform_7, window_bounds = array<i64: 1, 128>}]} {
    %c0 = arith.constant 0 : index
    %c0_0 = arith.constant 0 : index
    %0 = vector.load %arg2[%c0, %c0_0] : memref<128x128xbf16, #tpu.memory_space<vmem>>, vector<128x128xbf16>
    %c0_1 = arith.constant 0 : index
    %c0_2 = arith.constant 0 : index
    %1 = vector.load %arg1[%c0_1, %c0_2] : memref<128x128xbf16, #tpu.memory_space<vmem>>, vector<128x128xbf16>
    %cst = arith.constant dense<0.000000e+00> : vector<128x128xf32>
    %2 = tpu.matmul %0, %1, %cst {dimension_numbers = #tpu.dot_dimension_numbers<[1], [0], [0], [1], [0, 0, 1, 1], [], []>} : vector<128x128xbf16>, vector<128x128xbf16>, vector<128x128xf32> -> vector<128x128xf32>
    %c0_3 = arith.constant 0 : index
    %c0_4 = arith.constant 0 : index
    %3 = vector.load %arg3[%c0_3, %c0_4] : memref<128x1xf32, #tpu.memory_space<vmem>>, vector<128x1xf32>
    %4 = vector.broadcast %3 : vector<128x1xf32> to vector<128x128xf32>
    %5 = arith.addf %2, %4 : vector<128x128xf32>
    %cst_5 = arith.constant 0.000000e+00 : f32
    %6 = vector.broadcast %cst_5 : f32 to vector<128x128xf32>
    %7 = arith.maximumf %5, %6 : vector<128x128xf32>
    %c0_6 = arith.constant 0 : index
    %c0_7 = arith.constant 0 : index
    %c0_8 = arith.constant 0 : index
    %8 = vector.load %arg4[%c0_6, %c0_7, %c0_8] : memref<1x128x128xbf16, #tpu.memory_space<vmem>>, vector<1x128x128xbf16>
    %9 = vector.shape_cast %8 : vector<1x128x128xbf16> to vector<128x128xbf16>
    %10 = arith.truncf %7 : vector<128x128xf32> to vector<128x128xbf16>
    %cst_9 = arith.constant dense<0.000000e+00> : vector<128x128xf32>
    %11 = tpu.matmul %9, %10, %cst_9 {dimension_numbers = #tpu.dot_dimension_numbers<[1], [0], [0], [1], [0, 0, 1, 1], [], []>} : vector<128x128xbf16>, vector<128x128xbf16>, vector<128x128xf32> -> vector<128x128xf32>
    %c0_10 = arith.constant 0 : index
    %c0_11 = arith.constant 0 : index
    %c0_12 = arith.constant 0 : index
    %12 = vector.load %arg5[%c0_10, %c0_11, %c0_12] : memref<1x128x1xf32, #tpu.memory_space<vmem>>, vector<1x128x1xf32>
    %13 = vector.shape_cast %12 : vector<1x128x1xf32> to vector<128x1xf32>
    %14 = vector.broadcast %13 : vector<128x1xf32> to vector<128x128xf32>
    %15 = arith.addf %11, %14 : vector<128x128xf32>
    %cst_13 = arith.constant 0.000000e+00 : f32
    %16 = vector.broadcast %cst_13 : f32 to vector<128x128xf32>
    %17 = arith.maximumf %15, %16 : vector<128x128xf32>
    %c0_14 = arith.constant 0 : index
    %c0_15 = arith.constant 0 : index
    %18 = vector.load %arg6[%c0_14, %c0_15] : memref<8x128xbf16, #tpu.memory_space<vmem>>, vector<8x128xbf16>
    %19 = arith.truncf %17 : vector<128x128xf32> to vector<128x128xbf16>
    %cst_16 = arith.constant dense<0.000000e+00> : vector<8x128xf32>
    %20 = tpu.matmul %18, %19, %cst_16 {dimension_numbers = #tpu.dot_dimension_numbers<[1], [0], [0], [1], [0, 0, 1, 1], [], []>} : vector<8x128xbf16>, vector<128x128xbf16>, vector<8x128xf32> -> vector<8x128xf32>
    %21 = vector.extract_strided_slice %20 {offsets = [0, 0], sizes = [1, 128], strides = [1, 1]} : vector<8x128xf32> to vector<1x128xf32>
    %c0_17 = arith.constant 0 : index
    %22 = memref.load %arg7[%c0_17] : memref<1xf32, #tpu.memory_space<smem>>
    %23 = vector.broadcast %22 : f32 to vector<1x128xf32>
    %24 = arith.addf %21, %23 : vector<1x128xf32>
    %c0_18 = arith.constant 0 : index
    %c0_19 = arith.constant 0 : index
    %25 = vector.load %arg8[%c0_18, %c0_19] : memref<1x128xf32, #tpu.memory_space<vmem>>, vector<1x128xf32>
    tpu.vector_store %arg8[%c0_18, %c0_19], %24 {strides = array<i32>} : memref<1x128xf32, #tpu.memory_space<vmem>>, vector<1x128xf32>,
    return
  }
  func.func @transform_0(%arg0: i32) -> (i32, i32) {
    %c0_i32 = arith.constant 0 : i32
    %c0_i32_0 = arith.constant 0 : i32
    return %c0_i32, %arg0 : i32, i32
  }
  func.func @transform_1(%arg0: i32) -> (i32, i32) {
    %c0_i32 = arith.constant 0 : i32
    %c0_i32_0 = arith.constant 0 : i32
    %c0_i32_1 = arith.constant 0 : i32
    return %c0_i32, %c0_i32_0 : i32, i32
  }
  func.func @transform_2(%arg0: i32) -> (i32, i32) {
    %c0_i32 = arith.constant 0 : i32
    %c0_i32_0 = arith.constant 0 : i32
    %c0_i32_1 = arith.constant 0 : i32
    return %c0_i32, %c0_i32_0 : i32, i32
  }
  func.func @transform_3(%arg0: i32) -> (i32, i32, i32) {
    %c0_i32 = arith.constant 0 : i32
    %c0_i32_0 = arith.constant 0 : i32
    %c0_i32_1 = arith.constant 0 : i32
    %c0_i32_2 = arith.constant 0 : i32
    return %c0_i32, %c0_i32_0, %c0_i32_1 : i32, i32, i32
  }
  func.func @transform_4(%arg0: i32) -> (i32, i32, i32) {
    %c0_i32 = arith.constant 0 : i32
    %c0_i32_0 = arith.constant 0 : i32
    %c0_i32_1 = arith.constant 0 : i32
    %c0_i32_2 = arith.constant 0 : i32
    return %c0_i32, %c0_i32_0, %c0_i32_1 : i32, i32, i32
  }
  func.func @transform_5(%arg0: i32) -> (i32, i32) {
    %c0_i32 = arith.constant 0 : i32
    %c0_i32_0 = arith.constant 0 : i32
    %c0_i32_1 = arith.constant 0 : i32
    return %c0_i32, %c0_i32_0 : i32, i32
  }
  func.func @transform_6(%arg0: i32) -> i32 {
    %c0_i32 = arith.constant 0 : i32
    %c0_i32_0 = arith.constant 0 : i32
    return %c0_i32 : i32
  }
  func.func @transform_7(%arg0: i32) -> (i32, i32) {
    %c0_i32 = arith.constant 0 : i32
    %c0_i32_0 = arith.constant 0 : i32
    return %c0_i32, %arg0 : i32, i32
  }
}

module attributes {stable_mosaic.version = 11 : i64} {
  func.func @_ggd_fused_kernel(%arg0: i32, %arg1: memref<128x128xbf16, #tpu.memory_space<vmem>>, %arg2: memref<128x128xbf16, #tpu.memory_space<vmem>>, %arg3: memref<128x1xf32, #tpu.memory_space<vmem>>, %arg4: memref<1x128x128xbf16, #tpu.memory_space<vmem>>, %arg5: memref<1x128x1xf32, #tpu.memory_space<vmem>>, %arg6: memref<8x128xbf16, #tpu.memory_space<vmem>>, %arg7: memref<1xf32, #tpu.memory_space<smem>>, %arg8: memref<1x128xf32, #tpu.memory_space<vmem>>) attributes {dimension_semantics = [#tpu.dimension_semantics<parallel>], iteration_bounds = array<i64: 1>, scalar_prefetch = 0 : i64, scratch_operands = 0 : i64, tpu.core_type = #tpu.core_type<tc>, window_params = [{transform_indices = @transform_0, window_bounds = array<i64: 128, 128>}, {pipeline_mode = #tpu.pipeline_mode<synchronous>, transform_indices = @transform_1, window_bounds = array<i64: 128, 128>}, {pipeline_mode = #tpu.pipeline_mode<synchronous>, transform_indices = @transform_2, window_bounds = array<i64: 128, 1>}, {pipeline_mode = #tpu.pipeline_mode<synchronous>, transform_indices = @transform_3, window_bounds = array<i64: 1, 128, 128>}, {pipeline_mode = #tpu.pipeline_mode<synchronous>, transform_indices = @transform_4, window_bounds = array<i64: 1, 128, 1>}, {pipeline_mode = #tpu.pipeline_mode<synchronous>, transform_indices = @transform_5, window_bounds = array<i64: 8, 128>}, {transform_indices = @transform_6, window_bounds = array<i64: 1>}, {transform_indices = @transform_7, window_bounds = array<i64: 1, 128>}]} {
    %c0 = arith.constant 0 : index
    %c0_0 = arith.constant 0 : index
    %0 = vector.load %arg2[%c0, %c0_0] : memref<128x128xbf16, #tpu.memory_space<vmem>>, vector<128x128xbf16>
    %c0_1 = arith.constant 0 : index
    %c0_2 = arith.constant 0 : index
    %1 = vector.load %arg1[%c0_1, %c0_2] : memref<128x128xbf16, #tpu.memory_space<vmem>>, vector<128x128xbf16>
    %cst = arith.constant dense<0.000000e+00> : vector<128x128xf32>
    %2 = tpu.matmul %0, %1, %cst {dimension_numbers = #tpu.dot_dimension_numbers<[1], [0], [0], [1], [0, 0, 1, 1], [], []>} : vector<128x128xbf16>, vector<128x128xbf16>, vector<128x128xf32> -> vector<128x128xf32>
    %c0_3 = arith.constant 0 : index
    %c0_4 = arith.constant 0 : index
    %3 = vector.load %arg3[%c0_3, %c0_4] : memref<128x1xf32, #tpu.memory_space<vmem>>, vector<128x1xf32>
    %4 = vector.broadcast %3 : vector<128x1xf32> to vector<128x128xf32>
    %5 = arith.addf %2, %4 : vector<128x128xf32>
    %cst_5 = arith.constant 0.000000e+00 : f32
    %6 = vector.broadcast %cst_5 : f32 to vector<128x128xf32>
    %7 = arith.maximumf %5, %6 : vector<128x128xf32>
    %c0_6 = arith.constant 0 : index
    %c0_7 = arith.constant 0 : index
    %c0_8 = arith.constant 0 : index
    %8 = vector.load %arg4[%c0_6, %c0_7, %c0_8] : memref<1x128x128xbf16, #tpu.memory_space<vmem>>, vector<1x128x128xbf16>
    %9 = vector.shape_cast %8 : vector<1x128x128xbf16> to vector<128x128xbf16>
    %10 = arith.truncf %7 : vector<128x128xf32> to vector<128x128xbf16>
    %cst_9 = arith.constant dense<0.000000e+00> : vector<128x128xf32>
    %11 = tpu.matmul %9, %10, %cst_9 {dimension_numbers = #tpu.dot_dimension_numbers<[1], [0], [0], [1], [0, 0, 1, 1], [], []>} : vector<128x128xbf16>, vector<128x128xbf16>, vector<128x128xf32> -> vector<128x128xf32>
    %c0_10 = arith.constant 0 : index
    %c0_11 = arith.constant 0 : index
    %c0_12 = arith.constant 0 : index
    %12 = vector.load %arg5[%c0_10, %c0_11, %c0_12] : memref<1x128x1xf32, #tpu.memory_space<vmem>>, vector<1x128x1xf32>
    %13 = vector.shape_cast %12 : vector<1x128x1xf32> to vector<128x1xf32>
    %14 = vector.broadcast %13 : vector<128x1xf32> to vector<128x128xf32>
    %15 = arith.addf %11, %14 : vector<128x128xf32>
    %cst_13 = arith.constant 0.000000e+00 : f32
    %16 = vector.broadcast %cst_13 : f32 to vector<128x128xf32>
    %17 = arith.maximumf %15, %16 : vector<128x128xf32>
    %c0_14 = arith.constant 0 : index
    %c0_15 = arith.constant 0 : index
    %18 = vector.load %arg6[%c0_14, %c0_15] : memref<8x128xbf16, #tpu.memory_space<vmem>>, vector<8x128xbf16>
    %19 = arith.truncf %17 : vector<128x128xf32> to vector<128x128xbf16>
    %cst_16 = arith.constant dense<0.000000e+00> : vector<8x128xf32>
    %20 = tpu.matmul %18, %19, %cst_16 {dimension_numbers = #tpu.dot_dimension_numbers<[1], [0], [0], [1], [0, 0, 1, 1], [], []>} : vector<8x128xbf16>, vector<128x128xbf16>, vector<8x128xf32> -> vector<8x128xf32>
    %21 = vector.extract_strided_slice %20 {offsets = [0, 0], sizes = [1, 128], strides = [1, 1]} : vector<8x128xf32> to vector<1x128xf32>
    %c0_17 = arith.constant 0 : index
    %22 = memref.load %arg7[%c0_17] : memref<1xf32, #tpu.memory_space<smem>>
    %23 = vector.broadcast %22 : f32 to vector<1x128xf32>
    %24 = arith.addf %21, %23 : vector<1x128xf32>
    %c0_18 = arith.constant 0 : index
    %c0_19 = arith.constant 0 : index
    %25 = vector.load %arg8[%c0_18, %c0_19] : memref<1x128xf32, #tpu.memory_space<vmem>>, vector<1x128xf32>
    tpu.vector_store %arg8[%c0_18, %c0_19], %24 {strides = array<i32>} : memref<1x128xf32, #tpu.memory_space<vmem>>, vector<1x128xf32>,
    return
  }
  func.func @transform_0(%arg0: i32) -> (i32, i32) {
    %c0_i32 = arith.constant 0 : i32
    %c0_i32_0 = arith.constant 0 : i32
    return %c0_i32, %arg0 : i32, i32
  }
  func.func @transform_1(%arg0: i32) -> (i32, i32) {
    %c0_i32 = arith.constant 0 : i32
    %c0_i32_0 = arith.constant 0 : i32
    %c0_i32_1 = arith.constant 0 : i32
    return %c0_i32, %c0_i32_0 : i32, i32
  }
  func.func @transform_2(%arg0: i32) -> (i32, i32) {
    %c0_i32 = arith.constant 0 : i32
    %c0_i32_0 = arith.constant 0 : i32
    %c0_i32_1 = arith.constant 0 : i32
    return %c0_i32, %c0_i32_0 : i32, i32
  }
  func.func @transform_3(%arg0: i32) -> (i32, i32, i32) {
    %c0_i32 = arith.constant 0 : i32
    %c0_i32_0 = arith.constant 0 : i32
    %c0_i32_1 = arith.constant 0 : i32
    %c0_i32_2 = arith.constant 0 : i32
    return %c0_i32, %c0_i32_0, %c0_i32_1 : i32, i32, i32
  }
  func.func @transform_4(%arg0: i32) -> (i32, i32, i32) {
    %c0_i32 = arith.constant 0 : i32
    %c0_i32_0 = arith.constant 0 : i32
    %c0_i32_1 = arith.constant 0 : i32
    %c0_i32_2 = arith.constant 0 : i32
    return %c0_i32, %c0_i32_0, %c0_i32_1 : i32, i32, i32
  }
  func.func @transform_5(%arg0: i32) -> (i32, i32) {
    %c0_i32 = arith.constant 0 : i32
    %c0_i32_0 = arith.constant 0 : i32
    %c0_i32_1 = arith.constant 0 : i32
    return %c0_i32, %c0_i32_0 : i32, i32
  }
  func.func @transform_6(%arg0: i32) -> i32 {
    %c0_i32 = arith.constant 0 : i32
    %c0_i32_0 = arith.constant 0 : i32
    return %c0_i32 : i32
  }
  func.func @transform_7(%arg0: i32) -> (i32, i32) {
    %c0_i32 = arith.constant 0 : i32
    %c0_i32_0 = arith.constant 0 : i32
    return %c0_i32, %arg0 : i32, i32
  }
}

</mosaic_0001>

<llo_original>
// kernel: tpu_custom_call.1
$region0: #{tpu_custom_call.1}
  #allocation0 [shape = 'u32[]', space=smem, size = 0x4, offset = 0x4, fixed_abs, tag = 'smem constant byte address 0x4 - core index']
  #allocation1 [shape = 'u32[144,128]{1,0:T(1,128)}', space=vmem, size = 0x12000, scoped, tag = 'internal scratch']
  #allocation2 [shape = 'f32[1]{0:T(128)S(6)}', space=smem, size = 0x200, scoped, tag = 'scoped memory for tpu_custom_call.1']
  %s0 = inlined_call_operand.vmem [shape: bf16[128,128], index: 0, kind: input, shape index: {}]
  %s1 = inlined_call_operand.vmem [shape: bf16[128,128], index: 1, kind: input, shape index: {}]
  %s2 = inlined_call_operand.vmem [shape: f32[128,1], index: 2, kind: input, shape index: {}]
  %s3 = inlined_call_operand.vmem [shape: bf16[1,128,128], index: 3, kind: input, shape index: {}]
  %s4 = inlined_call_operand.vmem [shape: f32[1,128,1], index: 4, kind: input, shape index: {}]
  %s5 = inlined_call_operand.vmem [shape: bf16[8,128], index: 5, kind: input, shape index: {}]
  %s6 = inlined_call_operand.<no memory space> [shape: f32[1], index: 6, kind: input, shape index: {}]
  %s7 = inlined_call_operand.hbm [shape: f32[1,128], index: 7, kind: output, shape index: {}]
  %s8 = sld [smem:[#allocation0]]
  $region38: #{tpu_custom_call.1} parent=0
    _
  %s10 = ssub.s32 1, %s8
  %s11 = scalar_select 0, %s10, %s8
  %12 = sst [smem:[#allocation2]] %s6
  $region1: #{tpu_custom_call.1} parent=0
    #allocation3 [shape = 'u8[512]{0}', space=vmem, size = 0x400, scoped, tag = 'output window, operand 0, single buffered']
    #allocation4 [shape = 's32[1]{0}', space=sflag, size = 0x4, scoped, tag = 'scoped memory for tpu_custom_call.1']
    %13 = vsyncpa [#allocation4], 0
    // Predicated region
    $region2: #{tpu_custom_call.1} parent=1 // pred_check
      _
    $region3: #{tpu_custom_call.1} parent=1 // pred_check_branch
      %15 = sbr.rel (0) target = $region5
    $region4: #{tpu_custom_call.1} parent=1 // pred_region
      _
    $region5: #{tpu_custom_call.1} parent=1 // pred_fallthru
      _
    // Predicated region
    $region6: #{tpu_custom_call.1} parent=1 // pred_check
      _
    $region7: #{tpu_custom_call.1} parent=1 // pred_check_branch
      %17 = sbr.rel (0) target = $region9
    $region8: #{tpu_custom_call.1} parent=1 // pred_region
      _
    $region9: #{tpu_custom_call.1} parent=1 // pred_fallthru
      _
    // Predicated region
    $region10: #{tpu_custom_call.1} parent=1 // pred_check
      _
    $region11: #{tpu_custom_call.1} parent=1 // pred_check_branch
      %19 = sbr.rel (0) target = $region13
    $region12: #{tpu_custom_call.1} parent=1 // pred_region
      _
    $region13: #{tpu_custom_call.1} parent=1 // pred_fallthru
      _
    // Predicated region
    $region14: #{tpu_custom_call.1} parent=1 // pred_check
      _
    $region15: #{tpu_custom_call.1} parent=1 // pred_check_branch
      %21 = sbr.rel (0) target = $region17
    $region16: #{tpu_custom_call.1} parent=1 // pred_region
      _
    $region17: #{tpu_custom_call.1} parent=1 // pred_fallthru
      _
    // Predicated region
    $region18: #{tpu_custom_call.1} parent=1 // pred_check
      _
    $region19: #{tpu_custom_call.1} parent=1 // pred_check_branch
      %23 = sbr.rel (0) target = $region21
    $region20: #{tpu_custom_call.1} parent=1 // pred_region
      _
    $region21: #{tpu_custom_call.1} parent=1 // pred_fallthru
      _
    // Predicated region
    $region22: #{tpu_custom_call.1} parent=1 // pred_check
      _
    $region23: #{tpu_custom_call.1} parent=1 // pred_check_branch
      %25 = sbr.rel (0) target = $region25
    $region24: #{tpu_custom_call.1} parent=1 // pred_region
      _
    $region25: #{tpu_custom_call.1} parent=1 // pred_fallthru
      _
    // Predicated region
    $region26: #{tpu_custom_call.1} parent=1 // pred_check
      _
    $region27: #{tpu_custom_call.1} parent=1 // pred_check_branch
      %27 = sbr.rel (0) target = $region29
    $region28: #{tpu_custom_call.1} parent=1 // pred_region
      _
    $region29: #{tpu_custom_call.1} parent=1 // pred_fallthru
      _
    %v29 = vld [vmem:[%s1] sm:$0xf]
    %v30 = vld [vmem:[%s1 + $0x4] sm:$0xf]
    %v31 = vld [vmem:[%s1 + $0x8] sm:$0xf]
    %v32 = vld [vmem:[%s1 + $0xc] sm:$0xf]
    %v33 = vld [vmem:[%s1 + $0x10] sm:$0xf]
    %v34 = vld [vmem:[%s1 + $0x14] sm:$0xf]
    %v35 = vld [vmem:[%s1 + $0x18] sm:$0xf]
    %v36 = vld [vmem:[%s1 + $0x1c] sm:$0xf]
    %v37 = vld [vmem:[%s1 + $0x20] sm:$0xf]
    %v38 = vld [vmem:[%s1 + $0x24] sm:$0xf]
    %v39 = vld [vmem:[%s1 + $0x28] sm:$0xf]
    %v40 = vld [vmem:[%s1 + $0x2c] sm:$0xf]
    %v41 = vld [vmem:[%s1 + $0x30] sm:$0xf]
    %v42 = vld [vmem:[%s1 + $0x34] sm:$0xf]
    %v43 = vld [vmem:[%s1 + $0x38] sm:$0xf]
    %v44 = vld [vmem:[%s1 + $0x3c] sm:$0xf]
    %v45 = vld [vmem:[%s0] sm:$0xf]
    %v46 = vld [vmem:[%s0 + $0x4] sm:$0xf]
    %v47 = vld [vmem:[%s0 + $0x8] sm:$0xf]
    %v48 = vld [vmem:[%s0 + $0xc] sm:$0xf]
    %v49 = vld [vmem:[%s0 + $0x10] sm:$0xf]
    %v50 = vld [vmem:[%s0 + $0x14] sm:$0xf]
    %v51 = vld [vmem:[%s0 + $0x18] sm:$0xf]
    %v52 = vld [vmem:[%s0 + $0x1c] sm:$0xf]
    %v53 = vld [vmem:[%s0 + $0x20] sm:$0xf]
    %v54 = vld [vmem:[%s0 + $0x24] sm:$0xf]
    %v55 = vld [vmem:[%s0 + $0x28] sm:$0xf]
    %v56 = vld [vmem:[%s0 + $0x2c] sm:$0xf]
    %v57 = vld [vmem:[%s0 + $0x30] sm:$0xf]
    %v58 = vld [vmem:[%s0 + $0x34] sm:$0xf]
    %v59 = vld [vmem:[%s0 + $0x38] sm:$0xf]
    %v60 = vld [vmem:[%s0 + $0x3c] sm:$0xf]
    %v61 = vld [vmem:[%s2] sm:$0xff]
    %v62 = vld [vmem:[%s2 + $0x8] sm:$0xff]
    %v63 = vld [vmem:[%s2 + $0x10] sm:$0xff]
    %v64 = vld [vmem:[%s2 + $0x18] sm:$0xff]
    %v65 = vld [vmem:[%s2 + $0x20] sm:$0xff]
    %v66 = vld [vmem:[%s2 + $0x28] sm:$0xff]
    %v67 = vld [vmem:[%s2 + $0x30] sm:$0xff]
    %v68 = vld [vmem:[%s2 + $0x38] sm:$0xff]
    %v69 = vld [vmem:[%s2 + $0x40] sm:$0xff]
    %v70 = vld [vmem:[%s2 + $0x48] sm:$0xff]
    %v71 = vld [vmem:[%s2 + $0x50] sm:$0xff]
    %v72 = vld [vmem:[%s2 + $0x58] sm:$0xff]
    %v73 = vld [vmem:[%s2 + $0x60] sm:$0xff]
    %v74 = vld [vmem:[%s2 + $0x68] sm:$0xff]
    %v75 = vld [vmem:[%s2 + $0x70] sm:$0xff]
    %v76 = vld [vmem:[%s2 + $0x78] sm:$0xff]
    %78 = vset.pattern.permute.xlu0 0
    %79 = vperm.xlu0 %78, %v61
    %v80 = vpop.permute.xlu0 %79
    %83 = vset.pattern.permute.xlu0 0
    %84 = vperm.xlu0 %83, %v62
    %v85 = vpop.permute.xlu0 %84
    %88 = vset.pattern.permute.xlu0 0
    %89 = vperm.xlu0 %88, %v63
    %v90 = vpop.permute.xlu0 %89
    %93 = vset.pattern.permute.xlu0 0
    %94 = vperm.xlu0 %93, %v64
    %v95 = vpop.permute.xlu0 %94
    %98 = vset.pattern.permute.xlu0 0
    %99 = vperm.xlu0 %98, %v65
    %v100 = vpop.permute.xlu0 %99
    %103 = vset.pattern.permute.xlu0 0
    %104 = vperm.xlu0 %103, %v66
    %v105 = vpop.permute.xlu0 %104
    %108 = vset.pattern.permute.xlu0 0
    %109 = vperm.xlu0 %108, %v67
    %v110 = vpop.permute.xlu0 %109
    %113 = vset.pattern.permute.xlu0 0
    %114 = vperm.xlu0 %113, %v68
    %v115 = vpop.permute.xlu0 %114
    %118 = vset.pattern.permute.xlu0 0
    %119 = vperm.xlu0 %118, %v69
    %v120 = vpop.permute.xlu0 %119
    %123 = vset.pattern.permute.xlu0 0
    %124 = vperm.xlu0 %123, %v70
    %v125 = vpop.permute.xlu0 %124
    %128 = vset.pattern.permute.xlu0 0
    %129 = vperm.xlu0 %128, %v71
    %v130 = vpop.permute.xlu0 %129
    %133 = vset.pattern.permute.xlu0 0
    %134 = vperm.xlu0 %133, %v72
    %v135 = vpop.permute.xlu0 %134
    %138 = vset.pattern.permute.xlu0 0
    %139 = vperm.xlu0 %138, %v73
    %v140 = vpop.permute.xlu0 %139
    %143 = vset.pattern.permute.xlu0 0
    %144 = vperm.xlu0 %143, %v74
    %v145 = vpop.permute.xlu0 %144
    %148 = vset.pattern.permute.xlu0 0
    %149 = vperm.xlu0 %148, %v75
    %v150 = vpop.permute.xlu0 %149
    %153 = vset.pattern.permute.xlu0 0
    %154 = vperm.xlu0 %153, %v76
    %v155 = vpop.permute.xlu0 %154
    %v173 = vunpack.c.l.b16 %v29
    %v174 = vunpack.c.l.b16 %v30
    %v175 = vunpack.c.l.b16 %v31
    %v176 = vunpack.c.l.b16 %v32
    %v177 = vunpack.c.l.b16 %v33
    %v178 = vunpack.c.l.b16 %v34
    %v179 = vunpack.c.l.b16 %v35
    %v180 = vunpack.c.l.b16 %v36
    %v181 = vunpack.c.l.b16 %v37
    %v182 = vunpack.c.l.b16 %v38
    %v183 = vunpack.c.l.b16 %v39
    %v184 = vunpack.c.l.b16 %v40
    %v185 = vunpack.c.l.b16 %v41
    %v186 = vunpack.c.l.b16 %v42
    %v187 = vunpack.c.l.b16 %v43
    %v188 = vunpack.c.l.b16 %v44
    %v189 = vpack.c.b16 %v174, %v173
    %v190 = vpack.c.b16 %v176, %v175
    %v191 = vpack.c.b16 %v178, %v177
    %v192 = vpack.c.b16 %v180, %v179
    %v193 = vpack.c.b16 %v182, %v181
    %v194 = vpack.c.b16 %v184, %v183
    %v195 = vpack.c.b16 %v186, %v185
    %v196 = vpack.c.b16 %v188, %v187
    %v221 = vunpack.c.l.b16 %v45
    %v222 = vunpack.c.l.b16 %v46
    %v223 = vunpack.c.l.b16 %v47
    %v224 = vunpack.c.l.b16 %v48
    %v225 = vunpack.c.l.b16 %v49
    %v226 = vunpack.c.l.b16 %v50
    %v227 = vunpack.c.l.b16 %v51
    %v228 = vunpack.c.l.b16 %v52
    %v229 = vunpack.c.l.b16 %v53
    %v230 = vunpack.c.l.b16 %v54
    %v231 = vunpack.c.l.b16 %v55
    %v232 = vunpack.c.l.b16 %v56
    %v233 = vunpack.c.l.b16 %v57
    %v234 = vunpack.c.l.b16 %v58
    %v235 = vunpack.c.l.b16 %v59
    %v236 = vunpack.c.l.b16 %v60
    %v237 = vpack.c.b16 %v222, %v221
    %v238 = vpack.c.b16 %v224, %v223
    %v239 = vpack.c.b16 %v226, %v225
    %v240 = vpack.c.b16 %v228, %v227
    %v241 = vpack.c.b16 %v230, %v229
    %v242 = vpack.c.b16 %v232, %v231
    %v243 = vpack.c.b16 %v234, %v233
    %v244 = vpack.c.b16 %v236, %v235
    %253 = vmatprep.subr.bf16.mxu0 0
    %254 = vmatpush1.bf16.msra.mxu0 %v237
    %255 = vmatprep.subr.bf16.mxu0 0
    %256 = vmatpush1.bf16.msra.mxu0 %v238
    %257 = vmatprep.subr.bf16.mxu0 0
    %258 = vmatpush1.bf16.msra.mxu0 %v239
    %259 = vmatprep.subr.bf16.mxu0 0
    %260 = vmatpush1.bf16.msra.mxu0 %v240
    %261 = vmatprep.subr.bf16.mxu0 0
    %262 = vmatpush1.bf16.msra.mxu0 %v241
    %263 = vmatprep.subr.bf16.mxu0 0
    %264 = vmatpush1.bf16.msra.mxu0 %v242
    %265 = vmatprep.subr.bf16.mxu0 0
    %266 = vmatpush1.bf16.msra.mxu0 %v243
    %267 = vmatprep.subr.bf16.mxu0 0
    %268 = vmatpush1.bf16.msra.mxu0 %v244
    %269 = vmatprep.subr.bf16.mxu0 0
    %270 = vmatpush1.bf16.msra.mxu0 0
    %271 = vmatprep.subr.bf16.mxu0 0
    %272 = vmatpush1.bf16.msra.mxu0 0
    %273 = vmatprep.subr.bf16.mxu0 0
    %274 = vmatpush1.bf16.msra.mxu0 0
    %275 = vmatprep.subr.bf16.mxu0 0
    %276 = vmatpush1.bf16.msra.mxu0 0
    %277 = vmatprep.subr.bf16.mxu0 0
    %278 = vmatpush1.bf16.msra.mxu0 0
    %279 = vmatprep.subr.bf16.mxu0 0
    %280 = vmatpush1.bf16.msra.mxu0 0
    %281 = vmatprep.subr.bf16.mxu0 0
    %282 = vmatpush1.bf16.msra.mxu0 0
    %283 = vmatprep.subr.bf16.mxu0 0
    %284 = vmatpush1.bf16.msra.mxu0 0
    %285 = vmatprep.mubr.bf16.mxu0 0
    %286 = vmatmul.mubr.bf16.gmra.mrb[0].mxu0 %v189
    %v287 = vpop.f32.mrb[0].mxu0
    %v288 = vadd.f32 %v80, %v287
    %v289 = vpop.f32.mrb[0].mxu0
    %v290 = vpop.f32.mrb[0].mxu0
    %v291 = vadd.f32 %v85, %v290
    %v292 = vpop.f32.mrb[0].mxu0
    %293 = vmatprep.mubr.bf16.mxu0 0
    %294 = vmatmul.mubr.bf16.gmra.mrb[0].mxu0 %v190
    %v295 = vpop.f32.mrb[0].mxu0
    %v296 = vadd.f32 %v90, %v295
    %v297 = vpop.f32.mrb[0].mxu0
    %v298 = vpop.f32.mrb[0].mxu0
    %v299 = vadd.f32 %v95, %v298
    %v300 = vpop.f32.mrb[0].mxu0
    %301 = vmatprep.mubr.bf16.mxu0 0
    %302 = vmatmul.mubr.bf16.gmra.mrb[0].mxu0 %v191
    %v303 = vpop.f32.mrb[0].mxu0
    %v304 = vadd.f32 %v100, %v303
    %v305 = vpop.f32.mrb[0].mxu0
    %v306 = vpop.f32.mrb[0].mxu0
    %v307 = vadd.f32 %v105, %v306
    %v308 = vpop.f32.mrb[0].mxu0
    %309 = vmatprep.mubr.bf16.mxu0 0
    %310 = vmatmul.mubr.bf16.gmra.mrb[0].mxu0 %v192
    %v311 = vpop.f32.mrb[0].mxu0
    %v312 = vadd.f32 %v110, %v311
    %v313 = vpop.f32.mrb[0].mxu0
    %v314 = vpop.f32.mrb[0].mxu0
    %v315 = vadd.f32 %v115, %v314
    %v316 = vpop.f32.mrb[0].mxu0
    %317 = vmatprep.mubr.bf16.mxu0 0
    %318 = vmatmul.mubr.bf16.gmra.mrb[0].mxu0 %v193
    %v319 = vpop.f32.mrb[0].mxu0
    %v320 = vadd.f32 %v120, %v319
    %v321 = vpop.f32.mrb[0].mxu0
    %v322 = vpop.f32.mrb[0].mxu0
    %v323 = vadd.f32 %v125, %v322
    %v324 = vpop.f32.mrb[0].mxu0
    %325 = vmatprep.mubr.bf16.mxu0 0
    %326 = vmatmul.mubr.bf16.gmra.mrb[0].mxu0 %v194
    %v327 = vpop.f32.mrb[0].mxu0
    %v328 = vadd.f32 %v130, %v327
    %v329 = vpop.f32.mrb[0].mxu0
    %v330 = vpop.f32.mrb[0].mxu0
    %v331 = vadd.f32 %v135, %v330
    %v332 = vpop.f32.mrb[0].mxu0
    %333 = vmatprep.mubr.bf16.mxu0 0
    %334 = vmatmul.mubr.bf16.gmra.mrb[0].mxu0 %v195
    %v335 = vpop.f32.mrb[0].mxu0
    %v336 = vadd.f32 %v140, %v335
    %v337 = vpop.f32.mrb[0].mxu0
    %v338 = vpop.f32.mrb[0].mxu0
    %v339 = vadd.f32 %v145, %v338
    %v340 = vpop.f32.mrb[0].mxu0
    %341 = vmatprep.mubr.bf16.mxu0 0
    %342 = vmatmul.mubr.bf16.gmra.mrb[0].mxu0 %v196
    %v343 = vpop.f32.mrb[0].mxu0
    %v344 = vadd.f32 %v150, %v343
    %v345 = vpop.f32.mrb[0].mxu0
    %v346 = vpop.f32.mrb[0].mxu0
    %v347 = vadd.f32 %v155, %v346
    %v348 = vpop.f32.mrb[0].mxu0
    %349 = vdwg.mxu0
    %v350 = vmax.f32 %v288, 0.0
    %v351 = vmax.f32 %v291, 0.0
    %v352 = vmax.f32 %v296, 0.0
    %v353 = vmax.f32 %v299, 0.0
    %v354 = vmax.f32 %v304, 0.0
    %v355 = vmax.f32 %v307, 0.0
    %v356 = vmax.f32 %v312, 0.0
    %v357 = vmax.f32 %v315, 0.0
    %v358 = vmax.f32 %v320, 0.0
    %v359 = vmax.f32 %v323, 0.0
    %v360 = vmax.f32 %v328, 0.0
    %v361 = vmax.f32 %v331, 0.0
    %v362 = vmax.f32 %v336, 0.0
    %v363 = vmax.f32 %v339, 0.0
    %v364 = vmax.f32 %v344, 0.0
    %v365 = vmax.f32 %v347, 0.0
    %v366 = vld [vmem:[%s3] sm:$0xf]
    %v367 = vld [vmem:[%s3 + $0x4] sm:$0xf]
    %v368 = vld [vmem:[%s3 + $0x8] sm:$0xf]
    %v369 = vld [vmem:[%s3 + $0xc] sm:$0xf]
    %v370 = vld [vmem:[%s3 + $0x10] sm:$0xf]
    %v371 = vld [vmem:[%s3 + $0x14] sm:$0xf]
    %v372 = vld [vmem:[%s3 + $0x18] sm:$0xf]
    %v373 = vld [vmem:[%s3 + $0x1c] sm:$0xf]
    %v374 = vld [vmem:[%s3 + $0x20] sm:$0xf]
    %v375 = vld [vmem:[%s3 + $0x24] sm:$0xf]
    %v376 = vld [vmem:[%s3 + $0x28] sm:$0xf]
    %v377 = vld [vmem:[%s3 + $0x2c] sm:$0xf]
    %v378 = vld [vmem:[%s3 + $0x30] sm:$0xf]
    %v379 = vld [vmem:[%s3 + $0x34] sm:$0xf]
    %v380 = vld [vmem:[%s3 + $0x38] sm:$0xf]
    %v381 = vld [vmem:[%s3 + $0x3c] sm:$0xf]
    %v382 = vpack.c.bf16 %v351, %v350
    %v383 = vpack.c.bf16 %v353, %v352
    %v384 = vpack.c.bf16 %v355, %v354
    %v385 = vpack.c.bf16 %v357, %v356
    %v386 = vpack.c.bf16 %v359, %v358
    %v387 = vpack.c.bf16 %v361, %v360
    %v388 = vpack.c.bf16 %v363, %v362
    %v389 = vpack.c.bf16 %v365, %v364
    %v390 = vld [vmem:[%s4] sm:$0xff]
    %v391 = vld [vmem:[%s4 + $0x8] sm:$0xff]
    %v392 = vld [vmem:[%s4 + $0x10] sm:$0xff]
    %v393 = vld [vmem:[%s4 + $0x18] sm:$0xff]
    %v394 = vld [vmem:[%s4 + $0x20] sm:$0xff]
    %v395 = vld [vmem:[%s4 + $0x28] sm:$0xff]
    %v396 = vld [vmem:[%s4 + $0x30] sm:$0xff]
    %v397 = vld [vmem:[%s4 + $0x38] sm:$0xff]
    %v398 = vld [vmem:[%s4 + $0x40] sm:$0xff]
    %v399 = vld [vmem:[%s4 + $0x48] sm:$0xff]
    %v400 = vld [vmem:[%s4 + $0x50] sm:$0xff]
    %v401 = vld [vmem:[%s4 + $0x58] sm:$0xff]
    %v402 = vld [vmem:[%s4 + $0x60] sm:$0xff]
    %v403 = vld [vmem:[%s4 + $0x68] sm:$0xff]
    %v404 = vld [vmem:[%s4 + $0x70] sm:$0xff]
    %v405 = vld [vmem:[%s4 + $0x78] sm:$0xff]
    %407 = vset.pattern.permute.xlu0 0
    %408 = vperm.xlu0 %407, %v390
    %v409 = vpop.permute.xlu0 %408
    %412 = vset.pattern.permute.xlu0 0
    %413 = vperm.xlu0 %412, %v391
    %v414 = vpop.permute.xlu0 %413
    %417 = vset.pattern.permute.xlu0 0
    %418 = vperm.xlu0 %417, %v392
    %v419 = vpop.permute.xlu0 %418
    %422 = vset.pattern.permute.xlu0 0
    %423 = vperm.xlu0 %422, %v393
    %v424 = vpop.permute.xlu0 %423
    %427 = vset.pattern.permute.xlu0 0
    %428 = vperm.xlu0 %427, %v394
    %v429 = vpop.permute.xlu0 %428
    %432 = vset.pattern.permute.xlu0 0
    %433 = vperm.xlu0 %432, %v395
    %v434 = vpop.permute.xlu0 %433
    %437 = vset.pattern.permute.xlu0 0
    %438 = vperm.xlu0 %437, %v396
    %v439 = vpop.permute.xlu0 %438
    %442 = vset.pattern.permute.xlu0 0
    %443 = vperm.xlu0 %442, %v397
    %v444 = vpop.permute.xlu0 %443
    %447 = vset.pattern.permute.xlu0 0
    %448 = vperm.xlu0 %447, %v398
    %v449 = vpop.permute.xlu0 %448
    %452 = vset.pattern.permute.xlu0 0
    %453 = vperm.xlu0 %452, %v399
    %v454 = vpop.permute.xlu0 %453
    %457 = vset.pattern.permute.xlu0 0
    %458 = vperm.xlu0 %457, %v400
    %v459 = vpop.permute.xlu0 %458
    %462 = vset.pattern.permute.xlu0 0
    %463 = vperm.xlu0 %462, %v401
    %v464 = vpop.permute.xlu0 %463
    %467 = vset.pattern.permute.xlu0 0
    %468 = vperm.xlu0 %467, %v402
    %v469 = vpop.permute.xlu0 %468
    %472 = vset.pattern.permute.xlu0 0
    %473 = vperm.xlu0 %472, %v403
    %v474 = vpop.permute.xlu0 %473
    %477 = vset.pattern.permute.xlu0 0
    %478 = vperm.xlu0 %477, %v404
    %v479 = vpop.permute.xlu0 %478
    %482 = vset.pattern.permute.xlu0 0
    %483 = vperm.xlu0 %482, %v405
    %v484 = vpop.permute.xlu0 %483
    %v502 = vunpack.c.l.b16 %v366
    %v503 = vunpack.c.l.b16 %v367
    %v504 = vunpack.c.l.b16 %v368
    %v505 = vunpack.c.l.b16 %v369
    %v506 = vunpack.c.l.b16 %v370
    %v507 = vunpack.c.l.b16 %v371
    %v508 = vunpack.c.l.b16 %v372
    %v509 = vunpack.c.l.b16 %v373
    %v510 = vunpack.c.l.b16 %v374
    %v511 = vunpack.c.l.b16 %v375
    %v512 = vunpack.c.l.b16 %v376
    %v513 = vunpack.c.l.b16 %v377
    %v514 = vunpack.c.l.b16 %v378
    %v515 = vunpack.c.l.b16 %v379
    %v516 = vunpack.c.l.b16 %v380
    %v517 = vunpack.c.l.b16 %v381
    %v518 = vpack.c.b16 %v503, %v502
    %v519 = vpack.c.b16 %v505, %v504
    %v520 = vpack.c.b16 %v507, %v506
    %v521 = vpack.c.b16 %v509, %v508
    %v522 = vpack.c.b16 %v511, %v510
    %v523 = vpack.c.b16 %v513, %v512
    %v524 = vpack.c.b16 %v515, %v514
    %v525 = vpack.c.b16 %v517, %v516
    %534 = vmatprep.subr.bf16.mxu0 0
    %535 = vmatpush1.bf16.msra.mxu0 %v382
    %536 = vmatprep.subr.bf16.mxu0 0
    %537 = vmatpush1.bf16.msra.mxu0 %v383
    %538 = vmatprep.subr.bf16.mxu0 0
    %539 = vmatpush1.bf16.msra.mxu0 %v384
    %540 = vmatprep.subr.bf16.mxu0 0
    %541 = vmatpush1.bf16.msra.mxu0 %v385
    %542 = vmatprep.subr.bf16.mxu0 0
    %543 = vmatpush1.bf16.msra.mxu0 %v386
    %544 = vmatprep.subr.bf16.mxu0 0
    %545 = vmatpush1.bf16.msra.mxu0 %v387
    %546 = vmatprep.subr.bf16.mxu0 0
    %547 = vmatpush1.bf16.msra.mxu0 %v388
    %548 = vmatprep.subr.bf16.mxu0 0
    %549 = vmatpush1.bf16.msra.mxu0 %v389
    %550 = vmatprep.subr.bf16.mxu0 0
    %551 = vmatpush1.bf16.msra.mxu0 0
    %552 = vmatprep.subr.bf16.mxu0 0
    %553 = vmatpush1.bf16.msra.mxu0 0
    %554 = vmatprep.subr.bf16.mxu0 0
    %555 = vmatpush1.bf16.msra.mxu0 0
    %556 = vmatprep.subr.bf16.mxu0 0
    %557 = vmatpush1.bf16.msra.mxu0 0
    %558 = vmatprep.subr.bf16.mxu0 0
    %559 = vmatpush1.bf16.msra.mxu0 0
    %560 = vmatprep.subr.bf16.mxu0 0
    %561 = vmatpush1.bf16.msra.mxu0 0
    %562 = vmatprep.subr.bf16.mxu0 0
    %563 = vmatpush1.bf16.msra.mxu0 0
    %564 = vmatprep.subr.bf16.mxu0 0
    %565 = vmatpush1.bf16.msra.mxu0 0
    %566 = vmatprep.mubr.bf16.mxu0 0
    %567 = vmatmul.mubr.bf16.gmra.mrb[0].mxu0 %v518
    %v568 = vpop.f32.mrb[0].mxu0
    %v569 = vadd.f32 %v409, %v568
    %v570 = vpop.f32.mrb[0].mxu0
    %v571 = vpop.f32.mrb[0].mxu0
    %v572 = vadd.f32 %v414, %v571
    %v573 = vpop.f32.mrb[0].mxu0
    %574 = vmatprep.mubr.bf16.mxu0 0
    %575 = vmatmul.mubr.bf16.gmra.mrb[0].mxu0 %v519
    %v576 = vpop.f32.mrb[0].mxu0
    %v577 = vadd.f32 %v419, %v576
    %v578 = vpop.f32.mrb[0].mxu0
    %v579 = vpop.f32.mrb[0].mxu0
    %v580 = vadd.f32 %v424, %v579
    %v581 = vpop.f32.mrb[0].mxu0
    %582 = vmatprep.mubr.bf16.mxu0 0
    %583 = vmatmul.mubr.bf16.gmra.mrb[0].mxu0 %v520
    %v584 = vpop.f32.mrb[0].mxu0
    %v585 = vadd.f32 %v429, %v584
    %v586 = vpop.f32.mrb[0].mxu0
    %v587 = vpop.f32.mrb[0].mxu0
    %v588 = vadd.f32 %v434, %v587
    %v589 = vpop.f32.mrb[0].mxu0
    %590 = vmatprep.mubr.bf16.mxu0 0
    %591 = vmatmul.mubr.bf16.gmra.mrb[0].mxu0 %v521
    %v592 = vpop.f32.mrb[0].mxu0
    %v593 = vadd.f32 %v439, %v592
    %v594 = vpop.f32.mrb[0].mxu0
    %v595 = vpop.f32.mrb[0].mxu0
    %v596 = vadd.f32 %v444, %v595
    %v597 = vpop.f32.mrb[0].mxu0
    %598 = vmatprep.mubr.bf16.mxu0 0
    %599 = vmatmul.mubr.bf16.gmra.mrb[0].mxu0 %v522
    %v600 = vpop.f32.mrb[0].mxu0
    %v601 = vadd.f32 %v449, %v600
    %v602 = vpop.f32.mrb[0].mxu0
    %v603 = vpop.f32.mrb[0].mxu0
    %v604 = vadd.f32 %v454, %v603
    %v605 = vpop.f32.mrb[0].mxu0
    %606 = vmatprep.mubr.bf16.mxu0 0
    %607 = vmatmul.mubr.bf16.gmra.mrb[0].mxu0 %v523
    %v608 = vpop.f32.mrb[0].mxu0
    %v609 = vadd.f32 %v459, %v608
    %v610 = vpop.f32.mrb[0].mxu0
    %v611 = vpop.f32.mrb[0].mxu0
    %v612 = vadd.f32 %v464, %v611
    %v613 = vpop.f32.mrb[0].mxu0
    %614 = vmatprep.mubr.bf16.mxu0 0
    %615 = vmatmul.mubr.bf16.gmra.mrb[0].mxu0 %v524
    %v616 = vpop.f32.mrb[0].mxu0
    %v617 = vadd.f32 %v469, %v616
    %v618 = vpop.f32.mrb[0].mxu0
    %v619 = vpop.f32.mrb[0].mxu0
    %v620 = vadd.f32 %v474, %v619
    %v621 = vpop.f32.mrb[0].mxu0
    %622 = vmatprep.mubr.bf16.mxu0 0
    %623 = vmatmul.mubr.bf16.gmra.mrb[0].mxu0 %v525
    %v624 = vpop.f32.mrb[0].mxu0
    %v625 = vadd.f32 %v479, %v624
    %v626 = vpop.f32.mrb[0].mxu0
    %v627 = vpop.f32.mrb[0].mxu0
    %v628 = vadd.f32 %v484, %v627
    %v629 = vpop.f32.mrb[0].mxu0
    %630 = vdwg.mxu0
    %v631 = vmax.f32 %v569, 0.0
    %v632 = vmax.f32 %v572, 0.0
    %v633 = vmax.f32 %v577, 0.0
    %v634 = vmax.f32 %v580, 0.0
    %v635 = vmax.f32 %v585, 0.0
    %v636 = vmax.f32 %v588, 0.0
    %v637 = vmax.f32 %v593, 0.0
    %v638 = vmax.f32 %v596, 0.0
    %v639 = vmax.f32 %v601, 0.0
    %v640 = vmax.f32 %v604, 0.0
    %v641 = vmax.f32 %v609, 0.0
    %v642 = vmax.f32 %v612, 0.0
    %v643 = vmax.f32 %v617, 0.0
    %v644 = vmax.f32 %v620, 0.0
    %v645 = vmax.f32 %v625, 0.0
    %v646 = vmax.f32 %v628, 0.0
    %v647 = vld [vmem:[%s5] sm:$0xf]
    %v648 = vpack.c.bf16 %v632, %v631
    %v649 = vpack.c.bf16 %v634, %v633
    %v650 = vpack.c.bf16 %v636, %v635
    %v651 = vpack.c.bf16 %v638, %v637
    %v652 = vpack.c.bf16 %v640, %v639
    %v653 = vpack.c.bf16 %v642, %v641
    %v654 = vpack.c.bf16 %v644, %v643
    %v655 = vpack.c.bf16 %v646, %v645
    %656 = vmatprep.subr.bf16.mxu0 0
    %657 = vmatpush1.bf16.msra.mxu0 %v648
    %658 = vmatprep.subr.bf16.mxu0 0
    %659 = vmatpush1.bf16.msra.mxu0 %v649
    %660 = vmatprep.subr.bf16.mxu0 0
    %661 = vmatpush1.bf16.msra.mxu0 %v650
    %662 = vmatprep.subr.bf16.mxu0 0
    %663 = vmatpush1.bf16.msra.mxu0 %v651
    %664 = vmatprep.subr.bf16.mxu0 0
    %665 = vmatpush1.bf16.msra.mxu0 %v652
    %666 = vmatprep.subr.bf16.mxu0 0
    %667 = vmatpush1.bf16.msra.mxu0 %v653
    %668 = vmatprep.subr.bf16.mxu0 0
    %669 = vmatpush1.bf16.msra.mxu0 %v654
    %670 = vmatprep.subr.bf16.mxu0 0
    %671 = vmatpush1.bf16.msra.mxu0 %v655
    %672 = vmatprep.subr.bf16.mxu0 0
    %673 = vmatpush1.bf16.msra.mxu0 0
    %674 = vmatprep.subr.bf16.mxu0 0
    %675 = vmatpush1.bf16.msra.mxu0 0
    %676 = vmatprep.subr.bf16.mxu0 0
    %677 = vmatpush1.bf16.msra.mxu0 0
    %678 = vmatprep.subr.bf16.mxu0 0
    %679 = vmatpush1.bf16.msra.mxu0 0
    %680 = vmatprep.subr.bf16.mxu0 0
    %681 = vmatpush1.bf16.msra.mxu0 0
    %682 = vmatprep.subr.bf16.mxu0 0
    %683 = vmatpush1.bf16.msra.mxu0 0
    %684 = vmatprep.subr.bf16.mxu0 0
    %685 = vmatpush1.bf16.msra.mxu0 0
    %686 = vmatprep.subr.bf16.mxu0 0
    %687 = vmatpush1.bf16.msra.mxu0 0
    %688 = vmatprep.mubr.bf16.mxu0 0
    %689 = vmatmul.mubr.bf16.gmra.mrb[0].mxu0 %v647
    %v690 = vpop.f32.mrb[0].mxu0
    %v691 = vadd.f32 0.0, %v690
    %v692 = vpop.f32.mrb[0].mxu0
    %v693 = vpop.f32.mrb[0].mxu0
    %v694 = vpop.f32.mrb[0].mxu0
    %695 = vdwg.mxu0
    %s696 = sld [smem:[#allocation2]]
    %v697 = vstv %s696
    %v698 = vadd.f32 %v691, %v697
    %699 = vst [vmem:[#allocation3] sm:$0x1] %v698
    // Predicated region
    $region30: #{tpu_custom_call.1} parent=1 // pred_check
      _
    $region31: #{tpu_custom_call.1} parent=1 // pred_check_branch
      %701 = sbr.rel (0) target = $region33
    $region32: #{tpu_custom_call.1} parent=1 // pred_region
      %s703 = ssub.s32 16, 16
      %704 = vsyncadd [#allocation4], %s703
      %s706 = sshll.u32 [#allocation3], 4
      %s707 = int_to_ptr.vmem [resolvable:$true] %s706
      %709 = dma.vmem_to_hbm [thread:$0]  %s707, 16, %s7, [#allocation4]
    $region33: #{tpu_custom_call.1} parent=1 // pred_fallthru
      _
    // Predicated region
    $region34: #{tpu_custom_call.1} parent=1 // pred_check
      _
    $region35: #{tpu_custom_call.1} parent=1 // pred_check_branch
      %711 = sbr.rel (0) target = $region37
    $region36: #{tpu_custom_call.1} parent=1 // pred_region
      %712 = dma.done [#allocation4], 16
    $region37: #{tpu_custom_call.1} parent=1 // pred_fallthru
      _
    %713 = vsyncpa [#allocation4], 1

// kernel: tpu_custom_call.1
$region0: #{tpu_custom_call.1}
  #allocation0 [shape = 'u32[]', space=smem, size = 0x4, offset = 0x4, fixed_abs, tag = 'smem constant byte address 0x4 - core index']
  #allocation1 [shape = 'u32[144,128]{1,0:T(1,128)}', space=vmem, size = 0x12000, scoped, tag = 'internal scratch']
  #allocation2 [shape = 'f32[1]{0:T(128)S(6)}', space=smem, size = 0x200, scoped, tag = 'scoped memory for tpu_custom_call.1']
  %s0 = inlined_call_operand.vmem [shape: bf16[128,128], index: 0, kind: input, shape index: {}]
  %s1 = inlined_call_operand.vmem [shape: bf16[128,128], index: 1, kind: input, shape index: {}]
  %s2 = inlined_call_operand.vmem [shape: f32[128,1], index: 2, kind: input, shape index: {}]
  %s3 = inlined_call_operand.vmem [shape: bf16[1,128,128], index: 3, kind: input, shape index: {}]
  %s4 = inlined_call_operand.vmem [shape: f32[1,128,1], index: 4, kind: input, shape index: {}]
  %s5 = inlined_call_operand.vmem [shape: bf16[8,128], index: 5, kind: input, shape index: {}]
  %s6 = inlined_call_operand.<no memory space> [shape: f32[1], index: 6, kind: input, shape index: {}]
  %s7 = inlined_call_operand.hbm [shape: f32[1,128], index: 7, kind: output, shape index: {}]
  %s8 = sld [smem:[#allocation0]]
  $region38: #{tpu_custom_call.1} parent=0
    _
  %s10 = ssub.s32 1, %s8
  %s11 = scalar_select 0, %s10, %s8
  %12 = sst [smem:[#allocation2]] %s6
  $region1: #{tpu_custom_call.1} parent=0
    #allocation3 [shape = 'u8[512]{0}', space=vmem, size = 0x400, scoped, tag = 'output window, operand 0, single buffered']
    #allocation4 [shape = 's32[1]{0}', space=sflag, size = 0x4, scoped, tag = 'scoped memory for tpu_custom_call.1']
    %13 = vsyncpa [#allocation4], 0
    // Predicated region
    $region2: #{tpu_custom_call.1} parent=1 // pred_check
      _
    $region3: #{tpu_custom_call.1} parent=1 // pred_check_branch
      %15 = sbr.rel (0) target = $region5
    $region4: #{tpu_custom_call.1} parent=1 // pred_region
      _
    $region5: #{tpu_custom_call.1} parent=1 // pred_fallthru
      _
    // Predicated region
    $region6: #{tpu_custom_call.1} parent=1 // pred_check
      _
    $region7: #{tpu_custom_call.1} parent=1 // pred_check_branch
      %17 = sbr.rel (0) target = $region9
    $region8: #{tpu_custom_call.1} parent=1 // pred_region
      _
    $region9: #{tpu_custom_call.1} parent=1 // pred_fallthru
      _
    // Predicated region
    $region10: #{tpu_custom_call.1} parent=1 // pred_check
      _
    $region11: #{tpu_custom_call.1} parent=1 // pred_check_branch
      %19 = sbr.rel (0) target = $region13
    $region12: #{tpu_custom_call.1} parent=1 // pred_region
      _
    $region13: #{tpu_custom_call.1} parent=1 // pred_fallthru
      _
    // Predicated region
    $region14: #{tpu_custom_call.1} parent=1 // pred_check
      _
    $region15: #{tpu_custom_call.1} parent=1 // pred_check_branch
      %21 = sbr.rel (0) target = $region17
    $region16: #{tpu_custom_call.1} parent=1 // pred_region
      _
    $region17: #{tpu_custom_call.1} parent=1 // pred_fallthru
      _
    // Predicated region
    $region18: #{tpu_custom_call.1} parent=1 // pred_check
      _
    $region19: #{tpu_custom_call.1} parent=1 // pred_check_branch
      %23 = sbr.rel (0) target = $region21
    $region20: #{tpu_custom_call.1} parent=1 // pred_region
      _
    $region21: #{tpu_custom_call.1} parent=1 // pred_fallthru
      _
    // Predicated region
    $region22: #{tpu_custom_call.1} parent=1 // pred_check
      _
    $region23: #{tpu_custom_call.1} parent=1 // pred_check_branch
      %25 = sbr.rel (0) target = $region25
    $region24: #{tpu_custom_call.1} parent=1 // pred_region
      _
    $region25: #{tpu_custom_call.1} parent=1 // pred_fallthru
      _
    // Predicated region
    $region26: #{tpu_custom_call.1} parent=1 // pred_check
      _
    $region27: #{tpu_custom_call.1} parent=1 // pred_check_branch
      %27 = sbr.rel (0) target = $region29
    $region28: #{tpu_custom_call.1} parent=1 // pred_region
      _
    $region29: #{tpu_custom_call.1} parent=1 // pred_fallthru
      _
    %v29 = vld [vmem:[%s1] sm:$0xf]
    %v30 = vld [vmem:[%s1 + $0x4] sm:$0xf]
    %v31 = vld [vmem:[%s1 + $0x8] sm:$0xf]
    %v32 = vld [vmem:[%s1 + $0xc] sm:$0xf]
    %v33 = vld [vmem:[%s1 + $0x10] sm:$0xf]
    %v34 = vld [vmem:[%s1 + $0x14] sm:$0xf]
    %v35 = vld [vmem:[%s1 + $0x18] sm:$0xf]
    %v36 = vld [vmem:[%s1 + $0x1c] sm:$0xf]
    %v37 = vld [vmem:[%s1 + $0x20] sm:$0xf]
    %v38 = vld [vmem:[%s1 + $0x24] sm:$0xf]
    %v39 = vld [vmem:[%s1 + $0x28] sm:$0xf]
    %v40 = vld [vmem:[%s1 + $0x2c] sm:$0xf]
    %v41 = vld [vmem:[%s1 + $0x30] sm:$0xf]
    %v42 = vld [vmem:[%s1 + $0x34] sm:$0xf]
    %v43 = vld [vmem:[%s1 + $0x38] sm:$0xf]
    %v44 = vld [vmem:[%s1 + $0x3c] sm:$0xf]
    %v45 = vld [vmem:[%s0] sm:$0xf]
    %v46 = vld [vmem:[%s0 + $0x4] sm:$0xf]
    %v47 = vld [vmem:[%s0 + $0x8] sm:$0xf]
    %v48 = vld [vmem:[%s0 + $0xc] sm:$0xf]
    %v49 = vld [vmem:[%s0 + $0x10] sm:$0xf]
    %v50 = vld [vmem:[%s0 + $0x14] sm:$0xf]
    %v51 = vld [vmem:[%s0 + $0x18] sm:$0xf]
    %v52 = vld [vmem:[%s0 + $0x1c] sm:$0xf]
    %v53 = vld [vmem:[%s0 + $0x20] sm:$0xf]
    %v54 = vld [vmem:[%s0 + $0x24] sm:$0xf]
    %v55 = vld [vmem:[%s0 + $0x28] sm:$0xf]
    %v56 = vld [vmem:[%s0 + $0x2c] sm:$0xf]
    %v57 = vld [vmem:[%s0 + $0x30] sm:$0xf]
    %v58 = vld [vmem:[%s0 + $0x34] sm:$0xf]
    %v59 = vld [vmem:[%s0 + $0x38] sm:$0xf]
    %v60 = vld [vmem:[%s0 + $0x3c] sm:$0xf]
    %v61 = vld [vmem:[%s2] sm:$0xff]
    %v62 = vld [vmem:[%s2 + $0x8] sm:$0xff]
    %v63 = vld [vmem:[%s2 + $0x10] sm:$0xff]
    %v64 = vld [vmem:[%s2 + $0x18] sm:$0xff]
    %v65 = vld [vmem:[%s2 + $0x20] sm:$0xff]
    %v66 = vld [vmem:[%s2 + $0x28] sm:$0xff]
    %v67 = vld [vmem:[%s2 + $0x30] sm:$0xff]
    %v68 = vld [vmem:[%s2 + $0x38] sm:$0xff]
    %v69 = vld [vmem:[%s2 + $0x40] sm:$0xff]
    %v70 = vld [vmem:[%s2 + $0x48] sm:$0xff]
    %v71 = vld [vmem:[%s2 + $0x50] sm:$0xff]
    %v72 = vld [vmem:[%s2 + $0x58] sm:$0xff]
    %v73 = vld [vmem:[%s2 + $0x60] sm:$0xff]
    %v74 = vld [vmem:[%s2 + $0x68] sm:$0xff]
    %v75 = vld [vmem:[%s2 + $0x70] sm:$0xff]
    %v76 = vld [vmem:[%s2 + $0x78] sm:$0xff]
    %78 = vset.pattern.permute.xlu0 0
    %79 = vperm.xlu0 %78, %v61
    %v80 = vpop.permute.xlu0 %79
    %83 = vset.pattern.permute.xlu0 0
    %84 = vperm.xlu0 %83, %v62
    %v85 = vpop.permute.xlu0 %84
    %88 = vset.pattern.permute.xlu0 0
    %89 = vperm.xlu0 %88, %v63
    %v90 = vpop.permute.xlu0 %89
    %93 = vset.pattern.permute.xlu0 0
    %94 = vperm.xlu0 %93, %v64
    %v95 = vpop.permute.xlu0 %94
    %98 = vset.pattern.permute.xlu0 0
    %99 = vperm.xlu0 %98, %v65
    %v100 = vpop.permute.xlu0 %99
    %103 = vset.pattern.permute.xlu0 0
    %104 = vperm.xlu0 %103, %v66
    %v105 = vpop.permute.xlu0 %104
    %108 = vset.pattern.permute.xlu0 0
    %109 = vperm.xlu0 %108, %v67
    %v110 = vpop.permute.xlu0 %109
    %113 = vset.pattern.permute.xlu0 0
    %114 = vperm.xlu0 %113, %v68
    %v115 = vpop.permute.xlu0 %114
    %118 = vset.pattern.permute.xlu0 0
    %119 = vperm.xlu0 %118, %v69
    %v120 = vpop.permute.xlu0 %119
    %123 = vset.pattern.permute.xlu0 0
    %124 = vperm.xlu0 %123, %v70
    %v125 = vpop.permute.xlu0 %124
    %128 = vset.pattern.permute.xlu0 0
    %129 = vperm.xlu0 %128, %v71
    %v130 = vpop.permute.xlu0 %129
    %133 = vset.pattern.permute.xlu0 0
    %134 = vperm.xlu0 %133, %v72
    %v135 = vpop.permute.xlu0 %134
    %138 = vset.pattern.permute.xlu0 0
    %139 = vperm.xlu0 %138, %v73
    %v140 = vpop.permute.xlu0 %139
    %143 = vset.pattern.permute.xlu0 0
    %144 = vperm.xlu0 %143, %v74
    %v145 = vpop.permute.xlu0 %144
    %148 = vset.pattern.permute.xlu0 0
    %149 = vperm.xlu0 %148, %v75
    %v150 = vpop.permute.xlu0 %149
    %153 = vset.pattern.permute.xlu0 0
    %154 = vperm.xlu0 %153, %v76
    %v155 = vpop.permute.xlu0 %154
    %v173 = vunpack.c.l.b16 %v29
    %v174 = vunpack.c.l.b16 %v30
    %v175 = vunpack.c.l.b16 %v31
    %v176 = vunpack.c.l.b16 %v32
    %v177 = vunpack.c.l.b16 %v33
    %v178 = vunpack.c.l.b16 %v34
    %v179 = vunpack.c.l.b16 %v35
    %v180 = vunpack.c.l.b16 %v36
    %v181 = vunpack.c.l.b16 %v37
    %v182 = vunpack.c.l.b16 %v38
    %v183 = vunpack.c.l.b16 %v39
    %v184 = vunpack.c.l.b16 %v40
    %v185 = vunpack.c.l.b16 %v41
    %v186 = vunpack.c.l.b16 %v42
    %v187 = vunpack.c.l.b16 %v43
    %v188 = vunpack.c.l.b16 %v44
    %v189 = vpack.c.b16 %v174, %v173
    %v190 = vpack.c.b16 %v176, %v175
    %v191 = vpack.c.b16 %v178, %v177
    %v192 = vpack.c.b16 %v180, %v179
    %v193 = vpack.c.b16 %v182, %v181
    %v194 = vpack.c.b16 %v184, %v183
    %v195 = vpack.c.b16 %v186, %v185
    %v196 = vpack.c.b16 %v188, %v187
    %v221 = vunpack.c.l.b16 %v45
    %v222 = vunpack.c.l.b16 %v46
    %v223 = vunpack.c.l.b16 %v47
    %v224 = vunpack.c.l.b16 %v48
    %v225 = vunpack.c.l.b16 %v49
    %v226 = vunpack.c.l.b16 %v50
    %v227 = vunpack.c.l.b16 %v51
    %v228 = vunpack.c.l.b16 %v52
    %v229 = vunpack.c.l.b16 %v53
    %v230 = vunpack.c.l.b16 %v54
    %v231 = vunpack.c.l.b16 %v55
    %v232 = vunpack.c.l.b16 %v56
    %v233 = vunpack.c.l.b16 %v57
    %v234 = vunpack.c.l.b16 %v58
    %v235 = vunpack.c.l.b16 %v59
    %v236 = vunpack.c.l.b16 %v60
    %v237 = vpack.c.b16 %v222, %v221
    %v238 = vpack.c.b16 %v224, %v223
    %v239 = vpack.c.b16 %v226, %v225
    %v240 = vpack.c.b16 %v228, %v227
    %v241 = vpack.c.b16 %v230, %v229
    %v242 = vpack.c.b16 %v232, %v231
    %v243 = vpack.c.b16 %v234, %v233
    %v244 = vpack.c.b16 %v236, %v235
    %253 = vmatprep.subr.bf16.mxu0 0
    %254 = vmatpush1.bf16.msra.mxu0 %v237
    %255 = vmatprep.subr.bf16.mxu0 0
    %256 = vmatpush1.bf16.msra.mxu0 %v238
    %257 = vmatprep.subr.bf16.mxu0 0
    %258 = vmatpush1.bf16.msra.mxu0 %v239
    %259 = vmatprep.subr.bf16.mxu0 0
    %260 = vmatpush1.bf16.msra.mxu0 %v240
    %261 = vmatprep.subr.bf16.mxu0 0
    %262 = vmatpush1.bf16.msra.mxu0 %v241
    %263 = vmatprep.subr.bf16.mxu0 0
    %264 = vmatpush1.bf16.msra.mxu0 %v242
    %265 = vmatprep.subr.bf16.mxu0 0
    %266 = vmatpush1.bf16.msra.mxu0 %v243
    %267 = vmatprep.subr.bf16.mxu0 0
    %268 = vmatpush1.bf16.msra.mxu0 %v244
    %269 = vmatprep.subr.bf16.mxu0 0
    %270 = vmatpush1.bf16.msra.mxu0 0
    %271 = vmatprep.subr.bf16.mxu0 0
    %272 = vmatpush1.bf16.msra.mxu0 0
    %273 = vmatprep.subr.bf16.mxu0 0
    %274 = vmatpush1.bf16.msra.mxu0 0
    %275 = vmatprep.subr.bf16.mxu0 0
    %276 = vmatpush1.bf16.msra.mxu0 0
    %277 = vmatprep.subr.bf16.mxu0 0
    %278 = vmatpush1.bf16.msra.mxu0 0
    %279 = vmatprep.subr.bf16.mxu0 0
    %280 = vmatpush1.bf16.msra.mxu0 0
    %281 = vmatprep.subr.bf16.mxu0 0
    %282 = vmatpush1.bf16.msra.mxu0 0
    %283 = vmatprep.subr.bf16.mxu0 0
    %284 = vmatpush1.bf16.msra.mxu0 0
    %285 = vmatprep.mubr.bf16.mxu0 0
    %286 = vmatmul.mubr.bf16.gmra.mrb[0].mxu0 %v189
    %v287 = vpop.f32.mrb[0].mxu0
    %v288 = vadd.f32 %v80, %v287
    %v289 = vpop.f32.mrb[0].mxu0
    %v290 = vpop.f32.mrb[0].mxu0
    %v291 = vadd.f32 %v85, %v290
    %v292 = vpop.f32.mrb[0].mxu0
    %293 = vmatprep.mubr.bf16.mxu0 0
    %294 = vmatmul.mubr.bf16.gmra.mrb[0].mxu0 %v190
    %v295 = vpop.f32.mrb[0].mxu0
    %v296 = vadd.f32 %v90, %v295
    %v297 = vpop.f32.mrb[0].mxu0
    %v298 = vpop.f32.mrb[0].mxu0
    %v299 = vadd.f32 %v95, %v298
    %v300 = vpop.f32.mrb[0].mxu0
    %301 = vmatprep.mubr.bf16.mxu0 0
    %302 = vmatmul.mubr.bf16.gmra.mrb[0].mxu0 %v191
    %v303 = vpop.f32.mrb[0].mxu0
    %v304 = vadd.f32 %v100, %v303
    %v305 = vpop.f32.mrb[0].mxu0
    %v306 = vpop.f32.mrb[0].mxu0
    %v307 = vadd.f32 %v105, %v306
    %v308 = vpop.f32.mrb[0].mxu0
    %309 = vmatprep.mubr.bf16.mxu0 0
    %310 = vmatmul.mubr.bf16.gmra.mrb[0].mxu0 %v192
    %v311 = vpop.f32.mrb[0].mxu0
    %v312 = vadd.f32 %v110, %v311
    %v313 = vpop.f32.mrb[0].mxu0
    %v314 = vpop.f32.mrb[0].mxu0
    %v315 = vadd.f32 %v115, %v314
    %v316 = vpop.f32.mrb[0].mxu0
    %317 = vmatprep.mubr.bf16.mxu0 0
    %318 = vmatmul.mubr.bf16.gmra.mrb[0].mxu0 %v193
    %v319 = vpop.f32.mrb[0].mxu0
    %v320 = vadd.f32 %v120, %v319
    %v321 = vpop.f32.mrb[0].mxu0
    %v322 = vpop.f32.mrb[0].mxu0
    %v323 = vadd.f32 %v125, %v322
    %v324 = vpop.f32.mrb[0].mxu0
    %325 = vmatprep.mubr.bf16.mxu0 0
    %326 = vmatmul.mubr.bf16.gmra.mrb[0].mxu0 %v194
    %v327 = vpop.f32.mrb[0].mxu0
    %v328 = vadd.f32 %v130, %v327
    %v329 = vpop.f32.mrb[0].mxu0
    %v330 = vpop.f32.mrb[0].mxu0
    %v331 = vadd.f32 %v135, %v330
    %v332 = vpop.f32.mrb[0].mxu0
    %333 = vmatprep.mubr.bf16.mxu0 0
    %334 = vmatmul.mubr.bf16.gmra.mrb[0].mxu0 %v195
    %v335 = vpop.f32.mrb[0].mxu0
    %v336 = vadd.f32 %v140, %v335
    %v337 = vpop.f32.mrb[0].mxu0
    %v338 = vpop.f32.mrb[0].mxu0
    %v339 = vadd.f32 %v145, %v338
    %v340 = vpop.f32.mrb[0].mxu0
    %341 = vmatprep.mubr.bf16.mxu0 0
    %342 = vmatmul.mubr.bf16.gmra.mrb[0].mxu0 %v196
    %v343 = vpop.f32.mrb[0].mxu0
    %v344 = vadd.f32 %v150, %v343
    %v345 = vpop.f32.mrb[0].mxu0
    %v346 = vpop.f32.mrb[0].mxu0
    %v347 = vadd.f32 %v155, %v346
    %v348 = vpop.f32.mrb[0].mxu0
    %349 = vdwg.mxu0
    %v350 = vmax.f32 %v288, 0.0
    %v351 = vmax.f32 %v291, 0.0
    %v352 = vmax.f32 %v296, 0.0
    %v353 = vmax.f32 %v299, 0.0
    %v354 = vmax.f32 %v304, 0.0
    %v355 = vmax.f32 %v307, 0.0
    %v356 = vmax.f32 %v312, 0.0
    %v357 = vmax.f32 %v315, 0.0
    %v358 = vmax.f32 %v320, 0.0
    %v359 = vmax.f32 %v323, 0.0
    %v360 = vmax.f32 %v328, 0.0
    %v361 = vmax.f32 %v331, 0.0
    %v362 = vmax.f32 %v336, 0.0
    %v363 = vmax.f32 %v339, 0.0
    %v364 = vmax.f32 %v344, 0.0
    %v365 = vmax.f32 %v347, 0.0
    %v366 = vld [vmem:[%s3] sm:$0xf]
    %v367 = vld [vmem:[%s3 + $0x4] sm:$0xf]
    %v368 = vld [vmem:[%s3 + $0x8] sm:$0xf]
    %v369 = vld [vmem:[%s3 + $0xc] sm:$0xf]
    %v370 = vld [vmem:[%s3 + $0x10] sm:$0xf]
    %v371 = vld [vmem:[%s3 + $0x14] sm:$0xf]
    %v372 = vld [vmem:[%s3 + $0x18] sm:$0xf]
    %v373 = vld [vmem:[%s3 + $0x1c] sm:$0xf]
    %v374 = vld [vmem:[%s3 + $0x20] sm:$0xf]
    %v375 = vld [vmem:[%s3 + $0x24] sm:$0xf]
    %v376 = vld [vmem:[%s3 + $0x28] sm:$0xf]
    %v377 = vld [vmem:[%s3 + $0x2c] sm:$0xf]
    %v378 = vld [vmem:[%s3 + $0x30] sm:$0xf]
    %v379 = vld [vmem:[%s3 + $0x34] sm:$0xf]
    %v380 = vld [vmem:[%s3 + $0x38] sm:$0xf]
    %v381 = vld [vmem:[%s3 + $0x3c] sm:$0xf]
    %v382 = vpack.c.bf16 %v351, %v350
    %v383 = vpack.c.bf16 %v353, %v352
    %v384 = vpack.c.bf16 %v355, %v354
    %v385 = vpack.c.bf16 %v357, %v356
    %v386 = vpack.c.bf16 %v359, %v358
    %v387 = vpack.c.bf16 %v361, %v360
    %v388 = vpack.c.bf16 %v363, %v362
    %v389 = vpack.c.bf16 %v365, %v364
    %v390 = vld [vmem:[%s4] sm:$0xff]
    %v391 = vld [vmem:[%s4 + $0x8] sm:$0xff]
    %v392 = vld [vmem:[%s4 + $0x10] sm:$0xff]
    %v393 = vld [vmem:[%s4 + $0x18] sm:$0xff]
    %v394 = vld [vmem:[%s4 + $0x20] sm:$0xff]
    %v395 = vld [vmem:[%s4 + $0x28] sm:$0xff]
    %v396 = vld [vmem:[%s4 + $0x30] sm:$0xff]
    %v397 = vld [vmem:[%s4 + $0x38] sm:$0xff]
    %v398 = vld [vmem:[%s4 + $0x40] sm:$0xff]
    %v399 = vld [vmem:[%s4 + $0x48] sm:$0xff]
    %v400 = vld [vmem:[%s4 + $0x50] sm:$0xff]
    %v401 = vld [vmem:[%s4 + $0x58] sm:$0xff]
    %v402 = vld [vmem:[%s4 + $0x60] sm:$0xff]
    %v403 = vld [vmem:[%s4 + $0x68] sm:$0xff]
    %v404 = vld [vmem:[%s4 + $0x70] sm:$0xff]
    %v405 = vld [vmem:[%s4 + $0x78] sm:$0xff]
    %407 = vset.pattern.permute.xlu0 0
    %408 = vperm.xlu0 %407, %v390
    %v409 = vpop.permute.xlu0 %408
    %412 = vset.pattern.permute.xlu0 0
    %413 = vperm.xlu0 %412, %v391
    %v414 = vpop.permute.xlu0 %413
    %417 = vset.pattern.permute.xlu0 0
    %418 = vperm.xlu0 %417, %v392
    %v419 = vpop.permute.xlu0 %418
    %422 = vset.pattern.permute.xlu0 0
    %423 = vperm.xlu0 %422, %v393
    %v424 = vpop.permute.xlu0 %423
    %427 = vset.pattern.permute.xlu0 0
    %428 = vperm.xlu0 %427, %v394
    %v429 = vpop.permute.xlu0 %428
    %432 = vset.pattern.permute.xlu0 0
    %433 = vperm.xlu0 %432, %v395
    %v434 = vpop.permute.xlu0 %433
    %437 = vset.pattern.permute.xlu0 0
    %438 = vperm.xlu0 %437, %v396
    %v439 = vpop.permute.xlu0 %438
    %442 = vset.pattern.permute.xlu0 0
    %443 = vperm.xlu0 %442, %v397
    %v444 = vpop.permute.xlu0 %443
    %447 = vset.pattern.permute.xlu0 0
    %448 = vperm.xlu0 %447, %v398
    %v449 = vpop.permute.xlu0 %448
    %452 = vset.pattern.permute.xlu0 0
    %453 = vperm.xlu0 %452, %v399
    %v454 = vpop.permute.xlu0 %453
    %457 = vset.pattern.permute.xlu0 0
    %458 = vperm.xlu0 %457, %v400
    %v459 = vpop.permute.xlu0 %458
    %462 = vset.pattern.permute.xlu0 0
    %463 = vperm.xlu0 %462, %v401
    %v464 = vpop.permute.xlu0 %463
    %467 = vset.pattern.permute.xlu0 0
    %468 = vperm.xlu0 %467, %v402
    %v469 = vpop.permute.xlu0 %468
    %472 = vset.pattern.permute.xlu0 0
    %473 = vperm.xlu0 %472, %v403
    %v474 = vpop.permute.xlu0 %473
    %477 = vset.pattern.permute.xlu0 0
    %478 = vperm.xlu0 %477, %v404
    %v479 = vpop.permute.xlu0 %478
    %482 = vset.pattern.permute.xlu0 0
    %483 = vperm.xlu0 %482, %v405
    %v484 = vpop.permute.xlu0 %483
    %v502 = vunpack.c.l.b16 %v366
    %v503 = vunpack.c.l.b16 %v367
    %v504 = vunpack.c.l.b16 %v368
    %v505 = vunpack.c.l.b16 %v369
    %v506 = vunpack.c.l.b16 %v370
    %v507 = vunpack.c.l.b16 %v371
    %v508 = vunpack.c.l.b16 %v372
    %v509 = vunpack.c.l.b16 %v373
    %v510 = vunpack.c.l.b16 %v374
    %v511 = vunpack.c.l.b16 %v375
    %v512 = vunpack.c.l.b16 %v376
    %v513 = vunpack.c.l.b16 %v377
    %v514 = vunpack.c.l.b16 %v378
    %v515 = vunpack.c.l.b16 %v379
    %v516 = vunpack.c.l.b16 %v380
    %v517 = vunpack.c.l.b16 %v381
    %v518 = vpack.c.b16 %v503, %v502
    %v519 = vpack.c.b16 %v505, %v504
    %v520 = vpack.c.b16 %v507, %v506
    %v521 = vpack.c.b16 %v509, %v508
    %v522 = vpack.c.b16 %v511, %v510
    %v523 = vpack.c.b16 %v513, %v512
    %v524 = vpack.c.b16 %v515, %v514
    %v525 = vpack.c.b16 %v517, %v516
    %534 = vmatprep.subr.bf16.mxu0 0
    %535 = vmatpush1.bf16.msra.mxu0 %v382
    %536 = vmatprep.subr.bf16.mxu0 0
    %537 = vmatpush1.bf16.msra.mxu0 %v383
    %538 = vmatprep.subr.bf16.mxu0 0
    %539 = vmatpush1.bf16.msra.mxu0 %v384
    %540 = vmatprep.subr.bf16.mxu0 0
    %541 = vmatpush1.bf16.msra.mxu0 %v385
    %542 = vmatprep.subr.bf16.mxu0 0
    %543 = vmatpush1.bf16.msra.mxu0 %v386
    %544 = vmatprep.subr.bf16.mxu0 0
    %545 = vmatpush1.bf16.msra.mxu0 %v387
    %546 = vmatprep.subr.bf16.mxu0 0
    %547 = vmatpush1.bf16.msra.mxu0 %v388
    %548 = vmatprep.subr.bf16.mxu0 0
    %549 = vmatpush1.bf16.msra.mxu0 %v389
    %550 = vmatprep.subr.bf16.mxu0 0
    %551 = vmatpush1.bf16.msra.mxu0 0
    %552 = vmatprep.subr.bf16.mxu0 0
    %553 = vmatpush1.bf16.msra.mxu0 0
    %554 = vmatprep.subr.bf16.mxu0 0
    %555 = vmatpush1.bf16.msra.mxu0 0
    %556 = vmatprep.subr.bf16.mxu0 0
    %557 = vmatpush1.bf16.msra.mxu0 0
    %558 = vmatprep.subr.bf16.mxu0 0
    %559 = vmatpush1.bf16.msra.mxu0 0
    %560 = vmatprep.subr.bf16.mxu0 0
    %561 = vmatpush1.bf16.msra.mxu0 0
    %562 = vmatprep.subr.bf16.mxu0 0
    %563 = vmatpush1.bf16.msra.mxu0 0
    %564 = vmatprep.subr.bf16.mxu0 0
    %565 = vmatpush1.bf16.msra.mxu0 0
    %566 = vmatprep.mubr.bf16.mxu0 0
    %567 = vmatmul.mubr.bf16.gmra.mrb[0].mxu0 %v518
    %v568 = vpop.f32.mrb[0].mxu0
    %v569 = vadd.f32 %v409, %v568
    %v570 = vpop.f32.mrb[0].mxu0
    %v571 = vpop.f32.mrb[0].mxu0
    %v572 = vadd.f32 %v414, %v571
    %v573 = vpop.f32.mrb[0].mxu0
    %574 = vmatprep.mubr.bf16.mxu0 0
    %575 = vmatmul.mubr.bf16.gmra.mrb[0].mxu0 %v519
    %v576 = vpop.f32.mrb[0].mxu0
    %v577 = vadd.f32 %v419, %v576
    %v578 = vpop.f32.mrb[0].mxu0
    %v579 = vpop.f32.mrb[0].mxu0
    %v580 = vadd.f32 %v424, %v579
    %v581 = vpop.f32.mrb[0].mxu0
    %582 = vmatprep.mubr.bf16.mxu0 0
    %583 = vmatmul.mubr.bf16.gmra.mrb[0].mxu0 %v520
    %v584 = vpop.f32.mrb[0].mxu0
    %v585 = vadd.f32 %v429, %v584
    %v586 = vpop.f32.mrb[0].mxu0
    %v587 = vpop.f32.mrb[0].mxu0
    %v588 = vadd.f32 %v434, %v587
    %v589 = vpop.f32.mrb[0].mxu0
    %590 = vmatprep.mubr.bf16.mxu0 0
    %591 = vmatmul.mubr.bf16.gmra.mrb[0].mxu0 %v521
    %v592 = vpop.f32.mrb[0].mxu0
    %v593 = vadd.f32 %v439, %v592
    %v594 = vpop.f32.mrb[0].mxu0
    %v595 = vpop.f32.mrb[0].mxu0
    %v596 = vadd.f32 %v444, %v595
    %v597 = vpop.f32.mrb[0].mxu0
    %598 = vmatprep.mubr.bf16.mxu0 0
    %599 = vmatmul.mubr.bf16.gmra.mrb[0].mxu0 %v522
    %v600 = vpop.f32.mrb[0].mxu0
    %v601 = vadd.f32 %v449, %v600
    %v602 = vpop.f32.mrb[0].mxu0
    %v603 = vpop.f32.mrb[0].mxu0
    %v604 = vadd.f32 %v454, %v603
    %v605 = vpop.f32.mrb[0].mxu0
    %606 = vmatprep.mubr.bf16.mxu0 0
    %607 = vmatmul.mubr.bf16.gmra.mrb[0].mxu0 %v523
    %v608 = vpop.f32.mrb[0].mxu0
    %v609 = vadd.f32 %v459, %v608
    %v610 = vpop.f32.mrb[0].mxu0
    %v611 = vpop.f32.mrb[0].mxu0
    %v612 = vadd.f32 %v464, %v611
    %v613 = vpop.f32.mrb[0].mxu0
    %614 = vmatprep.mubr.bf16.mxu0 0
    %615 = vmatmul.mubr.bf16.gmra.mrb[0].mxu0 %v524
    %v616 = vpop.f32.mrb[0].mxu0
    %v617 = vadd.f32 %v469, %v616
    %v618 = vpop.f32.mrb[0].mxu0
    %v619 = vpop.f32.mrb[0].mxu0
    %v620 = vadd.f32 %v474, %v619
    %v621 = vpop.f32.mrb[0].mxu0
    %622 = vmatprep.mubr.bf16.mxu0 0
    %623 = vmatmul.mubr.bf16.gmra.mrb[0].mxu0 %v525
    %v624 = vpop.f32.mrb[0].mxu0
    %v625 = vadd.f32 %v479, %v624
    %v626 = vpop.f32.mrb[0].mxu0
    %v627 = vpop.f32.mrb[0].mxu0
    %v628 = vadd.f32 %v484, %v627
    %v629 = vpop.f32.mrb[0].mxu0
    %630 = vdwg.mxu0
    %v631 = vmax.f32 %v569, 0.0
    %v632 = vmax.f32 %v572, 0.0
    %v633 = vmax.f32 %v577, 0.0
    %v634 = vmax.f32 %v580, 0.0
    %v635 = vmax.f32 %v585, 0.0
    %v636 = vmax.f32 %v588, 0.0
    %v637 = vmax.f32 %v593, 0.0
    %v638 = vmax.f32 %v596, 0.0
    %v639 = vmax.f32 %v601, 0.0
    %v640 = vmax.f32 %v604, 0.0
    %v641 = vmax.f32 %v609, 0.0
    %v642 = vmax.f32 %v612, 0.0
    %v643 = vmax.f32 %v617, 0.0
    %v644 = vmax.f32 %v620, 0.0
    %v645 = vmax.f32 %v625, 0.0
    %v646 = vmax.f32 %v628, 0.0
    %v647 = vld [vmem:[%s5] sm:$0xf]
    %v648 = vpack.c.bf16 %v632, %v631
    %v649 = vpack.c.bf16 %v634, %v633
    %v650 = vpack.c.bf16 %v636, %v635
    %v651 = vpack.c.bf16 %v638, %v637
    %v652 = vpack.c.bf16 %v640, %v639
    %v653 = vpack.c.bf16 %v642, %v641
    %v654 = vpack.c.bf16 %v644, %v643
    %v655 = vpack.c.bf16 %v646, %v645
    %656 = vmatprep.subr.bf16.mxu0 0
    %657 = vmatpush1.bf16.msra.mxu0 %v648
    %658 = vmatprep.subr.bf16.mxu0 0
    %659 = vmatpush1.bf16.msra.mxu0 %v649
    %660 = vmatprep.subr.bf16.mxu0 0
    %661 = vmatpush1.bf16.msra.mxu0 %v650
    %662 = vmatprep.subr.bf16.mxu0 0
    %663 = vmatpush1.bf16.msra.mxu0 %v651
    %664 = vmatprep.subr.bf16.mxu0 0
    %665 = vmatpush1.bf16.msra.mxu0 %v652
    %666 = vmatprep.subr.bf16.mxu0 0
    %667 = vmatpush1.bf16.msra.mxu0 %v653
    %668 = vmatprep.subr.bf16.mxu0 0
    %669 = vmatpush1.bf16.msra.mxu0 %v654
    %670 = vmatprep.subr.bf16.mxu0 0
    %671 = vmatpush1.bf16.msra.mxu0 %v655
    %672 = vmatprep.subr.bf16.mxu0 0
    %673 = vmatpush1.bf16.msra.mxu0 0
    %674 = vmatprep.subr.bf16.mxu0 0
    %675 = vmatpush1.bf16.msra.mxu0 0
    %676 = vmatprep.subr.bf16.mxu0 0
    %677 = vmatpush1.bf16.msra.mxu0 0
    %678 = vmatprep.subr.bf16.mxu0 0
    %679 = vmatpush1.bf16.msra.mxu0 0
    %680 = vmatprep.subr.bf16.mxu0 0
    %681 = vmatpush1.bf16.msra.mxu0 0
    %682 = vmatprep.subr.bf16.mxu0 0
    %683 = vmatpush1.bf16.msra.mxu0 0
    %684 = vmatprep.subr.bf16.mxu0 0
    %685 = vmatpush1.bf16.msra.mxu0 0
    %686 = vmatprep.subr.bf16.mxu0 0
    %687 = vmatpush1.bf16.msra.mxu0 0
    %688 = vmatprep.mubr.bf16.mxu0 0
    %689 = vmatmul.mubr.bf16.gmra.mrb[0].mxu0 %v647
    %v690 = vpop.f32.mrb[0].mxu0
    %v691 = vadd.f32 0.0, %v690
    %v692 = vpop.f32.mrb[0].mxu0
    %v693 = vpop.f32.mrb[0].mxu0
    %v694 = vpop.f32.mrb[0].mxu0
    %695 = vdwg.mxu0
    %s696 = sld [smem:[#allocation2]]
    %v697 = vstv %s696
    %v698 = vadd.f32 %v691, %v697
    %699 = vst [vmem:[#allocation3] sm:$0x1] %v698
    // Predicated region
    $region30: #{tpu_custom_call.1} parent=1 // pred_check
      _
    $region31: #{tpu_custom_call.1} parent=1 // pred_check_branch
      %701 = sbr.rel (0) target = $region33
    $region32: #{tpu_custom_call.1} parent=1 // pred_region
      %s703 = ssub.s32 16, 16
      %704 = vsyncadd [#allocation4], %s703
      %s706 = sshll.u32 [#allocation3], 4
      %s707 = int_to_ptr.vmem [resolvable:$true] %s706
      %709 = dma.vmem_to_hbm [thread:$0]  %s707, 16, %s7, [#allocation4]
    $region33: #{tpu_custom_call.1} parent=1 // pred_fallthru
      _
    // Predicated region
    $region34: #{tpu_custom_call.1} parent=1 // pred_check
      _
    $region35: #{tpu_custom_call.1} parent=1 // pred_check_branch
      %711 = sbr.rel (0) target = $region37
    $region36: #{tpu_custom_call.1} parent=1 // pred_region
      %712 = dma.done [#allocation4], 16
    $region37: #{tpu_custom_call.1} parent=1 // pred_fallthru
      _
    %713 = vsyncpa [#allocation4], 1

</llo_original>
